<compile_context>
chip_gen: v6e
topology: v6e:2x2x1
jax: 0.10.0
libtpu: 0.0.40
codegen_flags: <defaults>
</compile_context>

<pallas_src>
import math
import functools

import jax
import jax.numpy as jnp
from jax import lax
from jax.experimental import pallas as pl
from jax.experimental.pallas import tpu as pltpu


# Explicit VMEM budget: stays under v7x's 64 MiB physical VMEM with headroom, and is
# well above v5e/v6e's default scoped limit (16/32 MiB), so large token tiles and
# resident weights can actually be double-buffered.
_VMEM_LIMIT_BYTES = 48 * 1024 * 1024


# ---------------------------------------------------------------------------
# In-kernel math helpers
# ---------------------------------------------------------------------------
def _erf(x):
    # Abramowitz & Stegun 7.1.26 rational approximation, |err| < 1.5e-7 (~f32 eps).
    # Reproduces torch.nn.GELU's exact (erf-based) activation without relying on an
    # erf primitive inside Mosaic.  The exp() goes to the EUP slot (near-free).
    a1, a2, a3, a4, a5 = 0.254829592, -0.284496736, 1.421413741, -1.453152027, 1.061405429
    p = 0.3275911
    sgn = jnp.where(x >= 0.0, 1.0, -1.0)
    ax = jnp.abs(x)
    t = 1.0 / (1.0 + p * ax)
    poly = ((((a5 * t + a4) * t + a3) * t + a2) * t + a1) * t
    y = 1.0 - poly * jnp.exp(-ax * ax)
    return sgn * y


def _gelu(x):
    # exact GELU: 0.5 * x * (1 + erf(x / sqrt(2)))  == torch.nn.GELU(approximate='none')
    return 0.5 * x * (1.0 + _erf(x * (1.0 / math.sqrt(2.0))))


def _layernorm(x, gamma, beta, eps):
    mu = jnp.mean(x, axis=-1, keepdims=True)
    xc = x - mu
    var = jnp.mean(xc * xc, axis=-1, keepdims=True)
    return xc * lax.rsqrt(var + eps) * gamma + beta


# ---------------------------------------------------------------------------
# Kernel 1: multi-head self-attention (one batch element per grid step)
# ---------------------------------------------------------------------------
def _attn_kernel(x_ref, wqkv_ref, bqkv_ref, wout_ref, bout_ref, o_ref, *,
                 nhead, matmul_dtype):
    x = x_ref[0]                                   # (S, E)
    S, E = x.shape
    dh = E // nhead
    scale = 1.0 / math.sqrt(dh)

    # Fused QKV projection: one (S,E)@(E,3E) MXU matmul, f32 accumulation.
    qkv = jnp.dot(x.astype(matmul_dtype), wqkv_ref[...].astype(matmul_dtype),
                  preferred_element_type=jnp.float32) + bqkv_ref[...]       # (S, 3E)
    q = qkv[:, :E] * scale
    k = qkv[:, E:2 * E]
    v = qkv[:, 2 * E:]

    # Per-head attention.  Contexts are concatenated so the output projection is
    # ONE (S,E)@(E,E) matmul with contraction K=E (full MXU) instead of nhead
    # narrow K=dh matmuls accumulated into a live register accumulator.
    # TODO(synk): for long sequences / many heads, switch to a flash-style
    # KV-tiled online softmax with heads folded onto the batch axis.
    ctx_parts = []
    for h in range(nhead):
        lo = h * dh
        qh = q[:, lo:lo + dh]
        kh = k[:, lo:lo + dh]
        vh = v[:, lo:lo + dh]
        # Contract the dh axes directly -> no explicit materialized transpose of K.
        s = lax.dot_general(qh.astype(matmul_dtype), kh.astype(matmul_dtype),
                            dimension_numbers=(((1,), (1,)), ((), ())),
                            preferred_element_type=jnp.float32)             # (S, S)
        s = s - jnp.max(s, axis=-1, keepdims=True)                           # XLU reduce
        p = jnp.exp(s)                                                       # EUP
        # softmax normalize via EUP reciprocal instead of a VALU divide
        p = p * pl.reciprocal(jnp.sum(p, axis=-1, keepdims=True), approx=True)
        ctx_parts.append(jnp.dot(p.astype(matmul_dtype), vh.astype(matmul_dtype),
                                 preferred_element_type=jnp.float32))        # (S, dh)
    ctx = jnp.concatenate(ctx_parts, axis=-1)                                # (S, E)

    o_ref[0] = jnp.dot(ctx.astype(matmul_dtype), wout_ref[...].astype(matmul_dtype),
                       preferred_element_type=jnp.float32) + bout_ref[...]


def multihead_self_attention(x_bm, wqkv_t, bqkv, wout_t, bout, *, nhead,
                             matmul_dtype=jnp.float32):
    # x_bm: (N, S, E); wqkv_t: (E, 3E); bqkv: (1, 3E); wout_t: (E, E); bout: (1, E)
    N, S, E = x_bm.shape
    kernel = functools.partial(_attn_kernel, nhead=nhead, matmul_dtype=matmul_dtype)
    cost = pl.CostEstimate(
        flops=N * (6 * S * E * E + 4 * S * S * E + 2 * S * E * E),
        transcendentals=N * nhead * S * S,
        bytes_accessed=4 * (2 * N * S * E + 4 * E * E + 4 * E),
    )
    return pl.pallas_call(
        kernel,
        out_shape=jax.ShapeDtypeStruct((N, S, E), jnp.float32),
        grid=(N,),
        in_specs=[
            pl.BlockSpec((1, S, E), lambda n: (n, 0, 0)),
            pl.BlockSpec((E, 3 * E), lambda n: (0, 0)),   # resident weights
            pl.BlockSpec((1, 3 * E), lambda n: (0, 0)),
            pl.BlockSpec((E, E), lambda n: (0, 0)),
            pl.BlockSpec((1, E), lambda n: (0, 0)),
        ],
        out_specs=pl.BlockSpec((1, S, E), lambda n: (n, 0, 0)),
        compiler_params=pltpu.CompilerParams(
            dimension_semantics=("parallel",),            # megacore shards batch on v7x
            vmem_limit_bytes=_VMEM_LIMIT_BYTES,
        ),
        cost_estimate=cost,
    )(x_bm, wqkv_t, bqkv, wout_t, bout)


# ---------------------------------------------------------------------------
# Kernel 2: adapter1 -> add&norm1 -> GELU FFN -> adapter2 -> add&norm2
# Tiled over tokens; weights stay VMEM-resident; token tiles are pipelined.
# ---------------------------------------------------------------------------
def _tail_kernel(src_ref, attn_ref,
                 wa11_ref, ba11_ref, wa12_ref, ba12_ref, g1_ref, bn1_ref,
                 w1_ref, b1_ref, w2_ref, b2_ref,
                 wa21_ref, ba21_ref, wa22_ref, ba22_ref, g2_ref, bn2_ref,
                 o_ref, *, eps, matmul_dtype):
    src = src_ref[...]            # (TM, E)
    a = attn_ref[...]             # dropout1 == identity (eval mode)

    def mm(x, w_ref, b_ref):
        return jnp.dot(x.astype(matmul_dtype), w_ref[...].astype(matmul_dtype),
                       preferred_element_type=jnp.float32) + b_ref[...]

    # adapter1: x + linear2(gelu(linear1(x)))  -> we only need the delta z here
    z = mm(_gelu(mm(a, wa11_ref, ba11_ref)), wa12_ref, ba12_ref)
    x = _layernorm(src + a + z, g1_ref[...], bn1_ref[...], eps)

    # feed-forward: linear2(dropout(gelu(linear1(x))))  (dropout == identity)
    ff = mm(_gelu(mm(x, w1_ref, b1_ref)), w2_ref, b2_ref)

    # adapter2
    z = mm(_gelu(mm(ff, wa21_ref, ba21_ref)), wa22_ref, ba22_ref)

    o_ref[...] = _layernorm(x + ff + z, g2_ref[...], bn2_ref[...], eps)


def _pick_tail_tile(T, E, F, A, budget_bytes=16 * 1024 * 1024, cap=1024):
    """Largest token tile (multiple of 8, <= cap) whose f32 working set fits the budget."""
    # per-row f32 bytes: double-buffered src/attn/out tiles (~6E) + residuals/temps (~4E)
    # + FFN hidden (F) + adapter hidden (A, twice); resident weights are not row-proportional.
    per_row_bytes = 4 * (10 * E + F + 2 * A)
    tm = budget_bytes // max(per_row_bytes, 1)
    tm = max(8, min(cap, (tm // 8) * 8))
    if tm >= T:
        return T          # single full block (full-dim escape works for any T)
    return tm             # multiple of 8; ragged last block is handled by Pallas


def encoder_tail(src_flat, attn_flat, tail_params, *, eps,
                 matmul_dtype=jnp.float32, tile_rows=None):
    T, E = src_flat.shape
    A = tail_params[0].shape[1]        # a1_w1_t: (E, A)
    F = tail_params[6].shape[1]        # lin1_w_t: (E, F)

    tm = tile_rows if tile_rows is not None else _pick_tail_tile(T, E, F, A)
    grid = (pl.cdiv(T, tm),)

    tok_spec = pl.BlockSpec((tm, E), lambda i: (i, 0))

    def resident(arr):
        # whole array, constant block index every step -> kept VMEM-resident
        return pl.BlockSpec(arr.shape, lambda i, nd=arr.ndim: (0,) * nd)

    in_specs = [tok_spec, tok_spec] + [resident(a) for a in tail_params]
    kernel = functools.partial(_tail_kernel, eps=eps, matmul_dtype=matmul_dtype)

    cost = pl.CostEstimate(
        flops=8 * T * E * A + 4 * T * E * F,
        transcendentals=T * (2 * A + F),
        bytes_accessed=4 * (3 * T * E + 4 * E * A + 2 * E * F + 6 * E + 2 * A + F),
    )
    return pl.pallas_call(
        kernel,
        out_shape=jax.ShapeDtypeStruct((T, E), jnp.float32),
        grid=grid,
        in_specs=in_specs,
        out_specs=tok_spec,
        compiler_params=pltpu.CompilerParams(
            dimension_semantics=("parallel",),            # token tiles are independent
            vmem_limit_bytes=_VMEM_LIMIT_BYTES,
        ),
        cost_estimate=cost,
    )(src_flat, attn_flat, *tail_params)


# ---------------------------------------------------------------------------
# Full forward (glue in plain JAX: one transpose in, one transpose out)
# ---------------------------------------------------------------------------
def transformer_encoder_layer(src, p, *, nhead, eps=1e-5, matmul_dtype=jnp.float32):
    # src: (S, N, E)  (batch_first=False, like the PyTorch module)
    # matmul_dtype=jnp.bfloat16 enables bf16 MXU inputs (f32 accumulation) on v6e/v7x.
    S, N, E = src.shape
    src = src.astype(jnp.float32)

    # Batch-major once; reused for attention AND the tail (no extra activation
    # transpose between the two kernels).
    x_bm = jnp.transpose(src, (1, 0, 2))                       # (N, S, E)

    attn_bm = multihead_self_attention(
        x_bm,
        p["in_proj_weight"].T,                                 # (E, 3E)
        p["in_proj_bias"].reshape(1, -1),                      # (1, 3E)
        p["out_proj_weight"].T,                                # (E, E)
        p["out_proj_bias"].reshape(1, -1),                     # (1, E)
        nhead=nhead, matmul_dtype=matmul_dtype,
    )

    src_flat = x_bm.reshape(N * S, E)       # contiguous -> free reshape
    attn_flat = attn_bm.reshape(N * S, E)   # contiguous -> free reshape (stays batch-major)

    tail_params = (
        p["a1_w1"].T, p["a1_b1"].reshape(1, -1),
        p["a1_w2"].T, p["a1_b2"].reshape(1, -1),
        p["norm1_g"].reshape(1, -1), p["norm1_b"].reshape(1, -1),
        p["lin1_w"].T, p["lin1_b"].reshape(1, -1),
        p["lin2_w"].T, p["lin2_b"].reshape(1, -1),
        p["a2_w1"].T, p["a2_b1"].reshape(1, -1),
        p["a2_w2"].T, p["a2_b2"].reshape(1, -1),
        p["norm2_g"].reshape(1, -1), p["norm2_b"].reshape(1, -1),
    )
    out_flat = encoder_tail(src_flat, attn_flat, tail_params, eps=eps,
                            matmul_dtype=matmul_dtype)
    return jnp.transpose(out_flat.reshape(N, S, E), (1, 0, 2))  # back to (S, N, E)


# ---------------------------------------------------------------------------
# Deterministic parameter construction (shapes follow the PyTorch __init__)
# ---------------------------------------------------------------------------
def make_params(key, d_model, nhead, adapter_size, dim_feedforward):
    ks = jax.random.split(key, 20)
    n = lambda k, shape, s=0.05: (s * jax.random.normal(k, shape)).astype(jnp.float32)
    E, A, F = d_model, adapter_size, dim_feedforward
    return {
        # nn.MultiheadAttention
        "in_proj_weight": n(ks[0], (3 * E, E)),
        "in_proj_bias":   n(ks[1], (3 * E,)),
        "out_proj_weight": n(ks[2], (E, E)),
        "out_proj_bias":   n(ks[3], (E,)),
        # adapter1
        "a1_w1": n(ks[4], (A, E)), "a1_b1": n(ks[5], (A,)),
        "a1_w2": n(ks[6], (E, A)), "a1_b2": n(ks[7], (E,)),
        # norm1
        "norm1_g": jnp.ones((E,), jnp.float32) + n(ks[8], (E,), 0.01),
        "norm1_b": n(ks[9], (E,), 0.01),
        # feed-forward
        "lin1_w": n(ks[10], (F, E)), "lin1_b": n(ks[11], (F,)),
        "lin2_w": n(ks[12], (E, F)), "lin2_b": n(ks[13], (E,)),
        # adapter2
        "a2_w1": n(ks[14], (A, E)), "a2_b1": n(ks[15], (A,)),
        "a2_w2": n(ks[16], (E, A)), "a2_b2": n(ks[17], (E,)),
        # norm2
        "norm2_g": jnp.ones((E,), jnp.float32) + n(ks[18], (E,), 0.01),
        "norm2_b": n(ks[19], (E,), 0.01),
    }


if __name__ == "__main__":
    S, N, E = 8, 2, 32          # seq, batch, d_model
    NHEAD = 4
    ADAPTER = 16
    DFF = 64

    root = jax.random.PRNGKey(0)
    k_x, k_p = jax.random.split(root)
    src = jax.random.normal(k_x, (S, N, E), dtype=jnp.float32)   # (S, N, E), batch_first=False
    params = make_params(k_p, E, NHEAD, ADAPTER, DFF)

    fwd = jax.jit(functools.partial(transformer_encoder_layer, nhead=NHEAD, eps=1e-5))
    out = jax.block_until_ready(fwd(src, params))
    assert out.shape == (S, N, E)
    assert bool(jnp.all(jnp.isfinite(out)))
    print("KERNEL_OK")
</pallas_src>

<mosaic_0001>
module attributes {stable_mosaic.version = 11 : i64} {
  func.func @_attn_kernel(%arg0: i32, %arg1: memref<1x8x32xf32, #tpu.memory_space<vmem>>, %arg2: memref<32x96xf32, #tpu.memory_space<vmem>>, %arg3: memref<1x96xf32, #tpu.memory_space<vmem>>, %arg4: memref<32x32xf32, #tpu.memory_space<vmem>>, %arg5: memref<1x32xf32, #tpu.memory_space<vmem>>, %arg6: memref<1x8x32xf32, #tpu.memory_space<vmem>>) attributes {dimension_semantics = [#tpu.dimension_semantics<parallel>], iteration_bounds = array<i64: 2>, scalar_prefetch = 0 : i64, scratch_operands = 0 : i64, tpu.core_type = #tpu.core_type<tc>, window_params = [{transform_indices = @transform_0, window_bounds = array<i64: 1, 8, 32>}, {pipeline_mode = #tpu.pipeline_mode<synchronous>, transform_indices = @transform_1, window_bounds = array<i64: 32, 96>}, {pipeline_mode = #tpu.pipeline_mode<synchronous>, transform_indices = @transform_2, window_bounds = array<i64: 1, 96>}, {pipeline_mode = #tpu.pipeline_mode<synchronous>, transform_indices = @transform_3, window_bounds = array<i64: 32, 32>}, {pipeline_mode = #tpu.pipeline_mode<synchronous>, transform_indices = @transform_4, window_bounds = array<i64: 1, 32>}, {transform_indices = @transform_5, window_bounds = array<i64: 1, 8, 32>}]} {
    %c0 = arith.constant 0 : index
    %c0_0 = arith.constant 0 : index
    %c0_1 = arith.constant 0 : index
    %0 = vector.load %arg1[%c0, %c0_0, %c0_1] : memref<1x8x32xf32, #tpu.memory_space<vmem>>, vector<1x8x32xf32>
    %1 = vector.shape_cast %0 : vector<1x8x32xf32> to vector<8x32xf32>
    %c0_2 = arith.constant 0 : index
    %c0_3 = arith.constant 0 : index
    %2 = vector.load %arg2[%c0_2, %c0_3] : memref<32x96xf32, #tpu.memory_space<vmem>>, vector<32x96xf32>
    %cst = arith.constant dense<0.000000e+00> : vector<8x96xf32>
    %3 = tpu.matmul %1, %2, %cst {dimension_numbers = #tpu.dot_dimension_numbers<[1], [0], [0], [1], [0, 0, 1, 1], [], []>} : vector<8x32xf32>, vector<32x96xf32>, vector<8x96xf32> -> vector<8x96xf32>
    %c0_4 = arith.constant 0 : index
    %c0_5 = arith.constant 0 : index
    %4 = vector.load %arg3[%c0_4, %c0_5] : memref<1x96xf32, #tpu.memory_space<vmem>>, vector<1x96xf32>
    %5 = vector.broadcast %4 : vector<1x96xf32> to vector<8x96xf32>
    %6 = arith.addf %3, %5 : vector<8x96xf32>
    %7 = vector.extract_strided_slice %6 {offsets = [0, 0], sizes = [8, 32], strides = [1, 1]} : vector<8x96xf32> to vector<8x32xf32>
    %cst_6 = arith.constant 0.353553385 : f32
    %8 = vector.broadcast %cst_6 : f32 to vector<8x32xf32>
    %9 = arith.mulf %7, %8 : vector<8x32xf32>
    %10 = vector.extract_strided_slice %6 {offsets = [0, 32], sizes = [8, 32], strides = [1, 1]} : vector<8x96xf32> to vector<8x32xf32>
    %11 = vector.extract_strided_slice %6 {offsets = [0, 64], sizes = [8, 32], strides = [1, 1]} : vector<8x96xf32> to vector<8x32xf32>
    %12 = vector.extract_strided_slice %9 {offsets = [0, 0], sizes = [8, 8], strides = [1, 1]} : vector<8x32xf32> to vector<8x8xf32>
    %13 = vector.extract_strided_slice %10 {offsets = [0, 0], sizes = [8, 8], strides = [1, 1]} : vector<8x32xf32> to vector<8x8xf32>
    %14 = vector.extract_strided_slice %11 {offsets = [0, 0], sizes = [8, 8], strides = [1, 1]} : vector<8x32xf32> to vector<8x8xf32>
    %cst_7 = arith.constant dense<0.000000e+00> : vector<8x8xf32>
    %15 = tpu.matmul %12, %13, %cst_7 {dimension_numbers = #tpu.dot_dimension_numbers<[1], [1], [0], [0], [0, 0, 1, 0], [], []>} : vector<8x8xf32>, vector<8x8xf32>, vector<8x8xf32> -> vector<8x8xf32>
    %cst_8 = arith.constant dense<0xFF800000> : vector<8xf32>
    %16 = vector.multi_reduction <maximumf>, %15, %cst_8 [1] : vector<8x8xf32> to vector<8xf32>
    %17 = vector.shape_cast %16 : vector<8xf32> to vector<8x1xf32>
    %18 = vector.broadcast %17 : vector<8x1xf32> to vector<8x8xf32>
    %19 = arith.subf %15, %18 : vector<8x8xf32>
    %20 = math.exp %19 : vector<8x8xf32>
    %cst_9 = arith.constant dense<0.000000e+00> : vector<8xf32>
    %21 = vector.multi_reduction <add>, %20, %cst_9 [1] : vector<8x8xf32> to vector<8xf32>
    %22 = vector.shape_cast %21 : vector<8xf32> to vector<8x1xf32>
    %23 = tpu.reciprocal %22 {approx = true} : vector<8x1xf32> -> vector<8x1xf32>
    %24 = vector.broadcast %23 : vector<8x1xf32> to vector<8x8xf32>
    %25 = arith.mulf %20, %24 : vector<8x8xf32>
    %cst_10 = arith.constant dense<0.000000e+00> : vector<8x8xf32>
    %26 = tpu.matmul %25, %14, %cst_10 {dimension_numbers = #tpu.dot_dimension_numbers<[1], [0], [0], [1], [0, 0, 1, 1], [], []>} : vector<8x8xf32>, vector<8x8xf32>, vector<8x8xf32> -> vector<8x8xf32>
    %27 = vector.extract_strided_slice %9 {offsets = [0, 8], sizes = [8, 8], strides = [1, 1]} : vector<8x32xf32> to vector<8x8xf32>
    %28 = vector.extract_strided_slice %10 {offsets = [0, 8], sizes = [8, 8], strides = [1, 1]} : vector<8x32xf32> to vector<8x8xf32>
    %29 = vector.extract_strided_slice %11 {offsets = [0, 8], sizes = [8, 8], strides = [1, 1]} : vector<8x32xf32> to vector<8x8xf32>
    %cst_11 = arith.constant dense<0.000000e+00> : vector<8x8xf32>
    %30 = tpu.matmul %27, %28, %cst_11 {dimension_numbers = #tpu.dot_dimension_numbers<[1], [1], [0], [0], [0, 0, 1, 0], [], []>} : vector<8x8xf32>, vector<8x8xf32>, vector<8x8xf32> -> vector<8x8xf32>
    %cst_12 = arith.constant dense<0xFF800000> : vector<8xf32>
    %31 = vector.multi_reduction <maximumf>, %30, %cst_12 [1] : vector<8x8xf32> to vector<8xf32>
    %32 = vector.shape_cast %31 : vector<8xf32> to vector<8x1xf32>
    %33 = vector.broadcast %32 : vector<8x1xf32> to vector<8x8xf32>
    %34 = arith.subf %30, %33 : vector<8x8xf32>
    %35 = math.exp %34 : vector<8x8xf32>
    %cst_13 = arith.constant dense<0.000000e+00> : vector<8xf32>
    %36 = vector.multi_reduction <add>, %35, %cst_13 [1] : vector<8x8xf32> to vector<8xf32>
    %37 = vector.shape_cast %36 : vector<8xf32> to vector<8x1xf32>
    %38 = tpu.reciprocal %37 {approx = true} : vector<8x1xf32> -> vector<8x1xf32>
    %39 = vector.broadcast %38 : vector<8x1xf32> to vector<8x8xf32>
    %40 = arith.mulf %35, %39 : vector<8x8xf32>
    %cst_14 = arith.constant dense<0.000000e+00> : vector<8x8xf32>
    %41 = tpu.matmul %40, %29, %cst_14 {dimension_numbers = #tpu.dot_dimension_numbers<[1], [0], [0], [1], [0, 0, 1, 1], [], []>} : vector<8x8xf32>, vector<8x8xf32>, vector<8x8xf32> -> vector<8x8xf32>
    %42 = vector.extract_strided_slice %9 {offsets = [0, 16], sizes = [8, 8], strides = [1, 1]} : vector<8x32xf32> to vector<8x8xf32>
    %43 = vector.extract_strided_slice %10 {offsets = [0, 16], sizes = [8, 8], strides = [1, 1]} : vector<8x32xf32> to vector<8x8xf32>
    %44 = vector.extract_strided_slice %11 {offsets = [0, 16], sizes = [8, 8], strides = [1, 1]} : vector<8x32xf32> to vector<8x8xf32>
    %cst_15 = arith.constant dense<0.000000e+00> : vector<8x8xf32>
    %45 = tpu.matmul %42, %43, %cst_15 {dimension_numbers = #tpu.dot_dimension_numbers<[1], [1], [0], [0], [0, 0, 1, 0], [], []>} : vector<8x8xf32>, vector<8x8xf32>, vector<8x8xf32> -> vector<8x8xf32>
    %cst_16 = arith.constant dense<0xFF800000> : vector<8xf32>
    %46 = vector.multi_reduction <maximumf>, %45, %cst_16 [1] : vector<8x8xf32> to vector<8xf32>
    %47 = vector.shape_cast %46 : vector<8xf32> to vector<8x1xf32>
    %48 = vector.broadcast %47 : vector<8x1xf32> to vector<8x8xf32>
    %49 = arith.subf %45, %48 : vector<8x8xf32>
    %50 = math.exp %49 : vector<8x8xf32>
    %cst_17 = arith.constant dense<0.000000e+00> : vector<8xf32>
    %51 = vector.multi_reduction <add>, %50, %cst_17 [1] : vector<8x8xf32> to vector<8xf32>
    %52 = vector.shape_cast %51 : vector<8xf32> to vector<8x1xf32>
    %53 = tpu.reciprocal %52 {approx = true} : vector<8x1xf32> -> vector<8x1xf32>
    %54 = vector.broadcast %53 : vector<8x1xf32> to vector<8x8xf32>
    %55 = arith.mulf %50, %54 : vector<8x8xf32>
    %cst_18 = arith.constant dense<0.000000e+00> : vector<8x8xf32>
    %56 = tpu.matmul %55, %44, %cst_18 {dimension_numbers = #tpu.dot_dimension_numbers<[1], [0], [0], [1], [0, 0, 1, 1], [], []>} : vector<8x8xf32>, vector<8x8xf32>, vector<8x8xf32> -> vector<8x8xf32>
    %57 = vector.extract_strided_slice %9 {offsets = [0, 24], sizes = [8, 8], strides = [1, 1]} : vector<8x32xf32> to vector<8x8xf32>
    %58 = vector.extract_strided_slice %10 {offsets = [0, 24], sizes = [8, 8], strides = [1, 1]} : vector<8x32xf32> to vector<8x8xf32>
    %59 = vector.extract_strided_slice %11 {offsets = [0, 24], sizes = [8, 8], strides = [1, 1]} : vector<8x32xf32> to vector<8x8xf32>
    %cst_19 = arith.constant dense<0.000000e+00> : vector<8x8xf32>
    %60 = tpu.matmul %57, %58, %cst_19 {dimension_numbers = #tpu.dot_dimension_numbers<[1], [1], [0], [0], [0, 0, 1, 0], [], []>} : vector<8x8xf32>, vector<8x8xf32>, vector<8x8xf32> -> vector<8x8xf32>
    %cst_20 = arith.constant dense<0xFF800000> : vector<8xf32>
    %61 = vector.multi_reduction <maximumf>, %60, %cst_20 [1] : vector<8x8xf32> to vector<8xf32>
    %62 = vector.shape_cast %61 : vector<8xf32> to vector<8x1xf32>
    %63 = vector.broadcast %62 : vector<8x1xf32> to vector<8x8xf32>
    %64 = arith.subf %60, %63 : vector<8x8xf32>
    %65 = math.exp %64 : vector<8x8xf32>
    %cst_21 = arith.constant dense<0.000000e+00> : vector<8xf32>
    %66 = vector.multi_reduction <add>, %65, %cst_21 [1] : vector<8x8xf32> to vector<8xf32>
    %67 = vector.shape_cast %66 : vector<8xf32> to vector<8x1xf32>
    %68 = tpu.reciprocal %67 {approx = true} : vector<8x1xf32> -> vector<8x1xf32>
    %69 = vector.broadcast %68 : vector<8x1xf32> to vector<8x8xf32>
    %70 = arith.mulf %65, %69 : vector<8x8xf32>
    %cst_22 = arith.constant dense<0.000000e+00> : vector<8x8xf32>
    %71 = tpu.matmul %70, %59, %cst_22 {dimension_numbers = #tpu.dot_dimension_numbers<[1], [0], [0], [1], [0, 0, 1, 1], [], []>} : vector<8x8xf32>, vector<8x8xf32>, vector<8x8xf32> -> vector<8x8xf32>
    %72 = tpu.concatenate %26, %41, %56, %71 in 1 : vector<8x8xf32>, vector<8x8xf32>, vector<8x8xf32>, vector<8x8xf32> -> vector<8x32xf32>
    %c0_23 = arith.constant 0 : index
    %c0_24 = arith.constant 0 : index
    %73 = vector.load %arg4[%c0_23, %c0_24] : memref<32x32xf32, #tpu.memory_space<vmem>>, vector<32x32xf32>
    %cst_25 = arith.constant dense<0.000000e+00> : vector<8x32xf32>
    %74 = tpu.matmul %72, %73, %cst_25 {dimension_numbers = #tpu.dot_dimension_numbers<[1], [0], [0], [1], [0, 0, 1, 1], [], []>} : vector<8x32xf32>, vector<32x32xf32>, vector<8x32xf32> -> vector<8x32xf32>
    %c0_26 = arith.constant 0 : index
    %c0_27 = arith.constant 0 : index
    %75 = vector.load %arg5[%c0_26, %c0_27] : memref<1x32xf32, #tpu.memory_space<vmem>>, vector<1x32xf32>
    %76 = vector.broadcast %75 : vector<1x32xf32> to vector<8x32xf32>
    %77 = arith.addf %74, %76 : vector<8x32xf32>
    %c0_28 = arith.constant 0 : index
    %c0_29 = arith.constant 0 : index
    %c0_30 = arith.constant 0 : index
    %78 = vector.load %arg6[%c0_28, %c0_29, %c0_30] : memref<1x8x32xf32, #tpu.memory_space<vmem>>, vector<1x8x32xf32>
    %79 = vector.shape_cast %78 : vector<1x8x32xf32> to vector<8x32xf32>
    %80 = vector.shape_cast %77 : vector<8x32xf32> to vector<1x8x32xf32>
    tpu.vector_store %arg6[%c0_28, %c0_29, %c0_30], %80 {strides = array<i32>} : memref<1x8x32xf32, #tpu.memory_space<vmem>>, vector<1x8x32xf32>,
    return
  }
  func.func @transform_0(%arg0: i32) -> (i32, i32, i32) {
    %c0_i32 = arith.constant 0 : i32
    %c0_i32_0 = arith.constant 0 : i32
    %c0_i32_1 = arith.constant 0 : i32
    return %arg0, %c0_i32, %c0_i32_0 : i32, i32, i32
  }
  func.func @transform_1(%arg0: i32) -> (i32, i32) {
    %c0_i32 = arith.constant 0 : i32
    %c0_i32_0 = arith.constant 0 : i32
    %c0_i32_1 = arith.constant 0 : i32
    return %c0_i32, %c0_i32_0 : i32, i32
  }
  func.func @transform_2(%arg0: i32) -> (i32, i32) {
    %c0_i32 = arith.constant 0 : i32
    %c0_i32_0 = arith.constant 0 : i32
    %c0_i32_1 = arith.constant 0 : i32
    return %c0_i32, %c0_i32_0 : i32, i32
  }
  func.func @transform_3(%arg0: i32) -> (i32, i32) {
    %c0_i32 = arith.constant 0 : i32
    %c0_i32_0 = arith.constant 0 : i32
    %c0_i32_1 = arith.constant 0 : i32
    return %c0_i32, %c0_i32_0 : i32, i32
  }
  func.func @transform_4(%arg0: i32) -> (i32, i32) {
    %c0_i32 = arith.constant 0 : i32
    %c0_i32_0 = arith.constant 0 : i32
    %c0_i32_1 = arith.constant 0 : i32
    return %c0_i32, %c0_i32_0 : i32, i32
  }
  func.func @transform_5(%arg0: i32) -> (i32, i32, i32) {
    %c0_i32 = arith.constant 0 : i32
    %c0_i32_0 = arith.constant 0 : i32
    %c0_i32_1 = arith.constant 0 : i32
    return %arg0, %c0_i32, %c0_i32_0 : i32, i32, i32
  }
}

module attributes {stable_mosaic.version = 11 : i64} {
  func.func @_tail_kernel(%arg0: i32, %arg1: memref<16x32xf32, #tpu.memory_space<vmem>>, %arg2: memref<16x32xf32, #tpu.memory_space<vmem>>, %arg3: memref<32x16xf32, #tpu.memory_space<vmem>>, %arg4: memref<1x16xf32, #tpu.memory_space<vmem>>, %arg5: memref<16x32xf32, #tpu.memory_space<vmem>>, %arg6: memref<1x32xf32, #tpu.memory_space<vmem>>, %arg7: memref<1x32xf32, #tpu.memory_space<vmem>>, %arg8: memref<1x32xf32, #tpu.memory_space<vmem>>, %arg9: memref<32x64xf32, #tpu.memory_space<vmem>>, %arg10: memref<1x64xf32, #tpu.memory_space<vmem>>, %arg11: memref<64x32xf32, #tpu.memory_space<vmem>>, %arg12: memref<1x32xf32, #tpu.memory_space<vmem>>, %arg13: memref<32x16xf32, #tpu.memory_space<vmem>>, %arg14: memref<1x16xf32, #tpu.memory_space<vmem>>, %arg15: memref<16x32xf32, #tpu.memory_space<vmem>>, %arg16: memref<1x32xf32, #tpu.memory_space<vmem>>, %arg17: memref<1x32xf32, #tpu.memory_space<vmem>>, %arg18: memref<1x32xf32, #tpu.memory_space<vmem>>, %arg19: memref<16x32xf32, #tpu.memory_space<vmem>>) attributes {dimension_semantics = [#tpu.dimension_semantics<parallel>], iteration_bounds = array<i64: 1>, scalar_prefetch = 0 : i64, scratch_operands = 0 : i64, tpu.core_type = #tpu.core_type<tc>, window_params = [{transform_indices = @transform_0, window_bounds = array<i64: 16, 32>}, {transform_indices = @transform_1, window_bounds = array<i64: 16, 32>}, {pipeline_mode = #tpu.pipeline_mode<synchronous>, transform_indices = @transform_2, window_bounds = array<i64: 32, 16>}, {pipeline_mode = #tpu.pipeline_mode<synchronous>, transform_indices = @transform_3, window_bounds = array<i64: 1, 16>}, {pipeline_mode = #tpu.pipeline_mode<synchronous>, transform_indices = @transform_4, window_bounds = array<i64: 16, 32>}, {pipeline_mode = #tpu.pipeline_mode<synchronous>, transform_indices = @transform_5, window_bounds = array<i64: 1, 32>}, {pipeline_mode = #tpu.pipeline_mode<synchronous>, transform_indices = @transform_6, window_bounds = array<i64: 1, 32>}, {pipeline_mode = #tpu.pipeline_mode<synchronous>, transform_indices = @transform_7, window_bounds = array<i64: 1, 32>}, {pipeline_mode = #tpu.pipeline_mode<synchronous>, transform_indices = @transform_8, window_bounds = array<i64: 32, 64>}, {pipeline_mode = #tpu.pipeline_mode<synchronous>, transform_indices = @transform_9, window_bounds = array<i64: 1, 64>}, {pipeline_mode = #tpu.pipeline_mode<synchronous>, transform_indices = @transform_10, window_bounds = array<i64: 64, 32>}, {pipeline_mode = #tpu.pipeline_mode<synchronous>, transform_indices = @transform_11, window_bounds = array<i64: 1, 32>}, {pipeline_mode = #tpu.pipeline_mode<synchronous>, transform_indices = @transform_12, window_bounds = array<i64: 32, 16>}, {pipeline_mode = #tpu.pipeline_mode<synchronous>, transform_indices = @transform_13, window_bounds = array<i64: 1, 16>}, {pipeline_mode = #tpu.pipeline_mode<synchronous>, transform_indices = @transform_14, window_bounds = array<i64: 16, 32>}, {pipeline_mode = #tpu.pipeline_mode<synchronous>, transform_indices = @transform_15, window_bounds = array<i64: 1, 32>}, {pipeline_mode = #tpu.pipeline_mode<synchronous>, transform_indices = @transform_16, window_bounds = array<i64: 1, 32>}, {pipeline_mode = #tpu.pipeline_mode<synchronous>, transform_indices = @transform_17, window_bounds = array<i64: 1, 32>}, {transform_indices = @transform_18, window_bounds = array<i64: 16, 32>}]} {
    %c0 = arith.constant 0 : index
    %c0_0 = arith.constant 0 : index
    %0 = vector.load %arg1[%c0, %c0_0] : memref<16x32xf32, #tpu.memory_space<vmem>>, vector<16x32xf32>
    %c0_1 = arith.constant 0 : index
    %c0_2 = arith.constant 0 : index
    %1 = vector.load %arg2[%c0_1, %c0_2] : memref<16x32xf32, #tpu.memory_space<vmem>>, vector<16x32xf32>
    %c0_3 = arith.constant 0 : index
    %c0_4 = arith.constant 0 : index
    %2 = vector.load %arg3[%c0_3, %c0_4] : memref<32x16xf32, #tpu.memory_space<vmem>>, vector<32x16xf32>
    %cst = arith.constant dense<0.000000e+00> : vector<16x16xf32>
    %3 = tpu.matmul %1, %2, %cst {dimension_numbers = #tpu.dot_dimension_numbers<[1], [0], [0], [1], [0, 0, 1, 1], [], []>} : vector<16x32xf32>, vector<32x16xf32>, vector<16x16xf32> -> vector<16x16xf32>
    %c0_5 = arith.constant 0 : index
    %c0_6 = arith.constant 0 : index
    %4 = vector.load %arg4[%c0_5, %c0_6] : memref<1x16xf32, #tpu.memory_space<vmem>>, vector<1x16xf32>
    %5 = vector.broadcast %4 : vector<1x16xf32> to vector<16x16xf32>
    %6 = arith.addf %3, %5 : vector<16x16xf32>
    %cst_7 = arith.constant 5.000000e-01 : f32
    %7 = vector.broadcast %cst_7 : f32 to vector<16x16xf32>
    %8 = arith.mulf %7, %6 : vector<16x16xf32>
    %cst_8 = arith.constant 0.707106769 : f32
    %9 = vector.broadcast %cst_8 : f32 to vector<16x16xf32>
    %10 = arith.mulf %6, %9 : vector<16x16xf32>
    %cst_9 = arith.constant 0.000000e+00 : f32
    %11 = vector.broadcast %cst_9 : f32 to vector<16x16xf32>
    %12 = arith.cmpf oge, %10, %11 : vector<16x16xf32>
    %cst_10 = arith.constant 1.000000e+00 : f32
    %cst_11 = arith.constant -1.000000e+00 : f32
    %13 = vector.broadcast %cst_10 : f32 to vector<16x16xf32>
    %14 = vector.broadcast %cst_11 : f32 to vector<16x16xf32>
    %15 = arith.select %12, %13, %14 : vector<16x16xi1>, vector<16x16xf32>
    %16 = math.absf %10 : vector<16x16xf32>
    %cst_12 = arith.constant 0.327591091 : f32
    %17 = vector.broadcast %cst_12 : f32 to vector<16x16xf32>
    %18 = arith.mulf %17, %16 : vector<16x16xf32>
    %cst_13 = arith.constant 1.000000e+00 : f32
    %19 = vector.broadcast %cst_13 : f32 to vector<16x16xf32>
    %20 = arith.addf %19, %18 : vector<16x16xf32>
    %cst_14 = arith.constant 1.000000e+00 : f32
    %21 = vector.broadcast %cst_14 : f32 to vector<16x16xf32>
    %22 = arith.divf %21, %20 : vector<16x16xf32>
    %cst_15 = arith.constant 1.06140542 : f32
    %23 = vector.broadcast %cst_15 : f32 to vector<16x16xf32>
    %24 = arith.mulf %23, %22 : vector<16x16xf32>
    %cst_16 = arith.constant -1.45315206 : f32
    %25 = vector.broadcast %cst_16 : f32 to vector<16x16xf32>
    %26 = arith.addf %24, %25 : vector<16x16xf32>
    %27 = arith.mulf %26, %22 : vector<16x16xf32>
    %cst_17 = arith.constant 1.42141378 : f32
    %28 = vector.broadcast %cst_17 : f32 to vector<16x16xf32>
    %29 = arith.addf %27, %28 : vector<16x16xf32>
    %30 = arith.mulf %29, %22 : vector<16x16xf32>
    %cst_18 = arith.constant -0.284496725 : f32
    %31 = vector.broadcast %cst_18 : f32 to vector<16x16xf32>
    %32 = arith.addf %30, %31 : vector<16x16xf32>
    %33 = arith.mulf %32, %22 : vector<16x16xf32>
    %cst_19 = arith.constant 0.254829586 : f32
    %34 = vector.broadcast %cst_19 : f32 to vector<16x16xf32>
    %35 = arith.addf %33, %34 : vector<16x16xf32>
    %36 = arith.mulf %35, %22 : vector<16x16xf32>
    %cst_20 = arith.constant 0.000000e+00 : f32
    %37 = vector.broadcast %cst_20 : f32 to vector<16x16xf32>
    %38 = arith.subf %37, %16 : vector<16x16xf32>
    %39 = arith.mulf %38, %16 : vector<16x16xf32>
    %40 = math.exp %39 : vector<16x16xf32>
    %41 = arith.mulf %36, %40 : vector<16x16xf32>
    %cst_21 = arith.constant 1.000000e+00 : f32
    %42 = vector.broadcast %cst_21 : f32 to vector<16x16xf32>
    %43 = arith.subf %42, %41 : vector<16x16xf32>
    %44 = arith.mulf %15, %43 : vector<16x16xf32>
    %cst_22 = arith.constant 1.000000e+00 : f32
    %45 = vector.broadcast %cst_22 : f32 to vector<16x16xf32>
    %46 = arith.addf %45, %44 : vector<16x16xf32>
    %47 = arith.mulf %8, %46 : vector<16x16xf32>
    %c0_23 = arith.constant 0 : index
    %c0_24 = arith.constant 0 : index
    %48 = vector.load %arg5[%c0_23, %c0_24] : memref<16x32xf32, #tpu.memory_space<vmem>>, vector<16x32xf32>
    %cst_25 = arith.constant dense<0.000000e+00> : vector<16x32xf32>
    %49 = tpu.matmul %47, %48, %cst_25 {dimension_numbers = #tpu.dot_dimension_numbers<[1], [0], [0], [1], [0, 0, 1, 1], [], []>} : vector<16x16xf32>, vector<16x32xf32>, vector<16x32xf32> -> vector<16x32xf32>
    %c0_26 = arith.constant 0 : index
    %c0_27 = arith.constant 0 : index
    %50 = vector.load %arg6[%c0_26, %c0_27] : memref<1x32xf32, #tpu.memory_space<vmem>>, vector<1x32xf32>
    %51 = vector.broadcast %50 : vector<1x32xf32> to vector<16x32xf32>
    %52 = arith.addf %49, %51 : vector<16x32xf32>
    %53 = arith.addf %0, %1 : vector<16x32xf32>
    %54 = arith.addf %53, %52 : vector<16x32xf32>
    %c0_28 = arith.constant 0 : index
    %c0_29 = arith.constant 0 : index
    %55 = vector.load %arg7[%c0_28, %c0_29] : memref<1x32xf32, #tpu.memory_space<vmem>>, vector<1x32xf32>
    %c0_30 = arith.constant 0 : index
    %c0_31 = arith.constant 0 : index
    %56 = vector.load %arg8[%c0_30, %c0_31] : memref<1x32xf32, #tpu.memory_space<vmem>>, vector<1x32xf32>
    %cst_32 = arith.constant dense<0.000000e+00> : vector<16xf32>
    %57 = vector.multi_reduction <add>, %54, %cst_32 [1] : vector<16x32xf32> to vector<16xf32>
    %58 = vector.shape_cast %57 : vector<16xf32> to vector<16x1xf32>
    %cst_33 = arith.constant 3.200000e+01 : f32
    %59 = vector.broadcast %cst_33 : f32 to vector<16x1xf32>
    %60 = arith.divf %58, %59 : vector<16x1xf32>
    %61 = vector.broadcast %60 : vector<16x1xf32> to vector<16x32xf32>
    %62 = arith.subf %54, %61 : vector<16x32xf32>
    %63 = arith.mulf %62, %62 : vector<16x32xf32>
    %cst_34 = arith.constant dense<0.000000e+00> : vector<16xf32>
    %64 = vector.multi_reduction <add>, %63, %cst_34 [1] : vector<16x32xf32> to vector<16xf32>
    %65 = vector.shape_cast %64 : vector<16xf32> to vector<16x1xf32>
    %cst_35 = arith.constant 3.200000e+01 : f32
    %66 = vector.broadcast %cst_35 : f32 to vector<16x1xf32>
    %67 = arith.divf %65, %66 : vector<16x1xf32>
    %cst_36 = arith.constant 9.99999974E-6 : f32
    %68 = vector.broadcast %cst_36 : f32 to vector<16x1xf32>
    %69 = arith.addf %67, %68 : vector<16x1xf32>
    %70 = math.rsqrt %69 : vector<16x1xf32>
    %71 = vector.broadcast %70 : vector<16x1xf32> to vector<16x32xf32>
    %72 = arith.mulf %62, %71 : vector<16x32xf32>
    %73 = vector.broadcast %55 : vector<1x32xf32> to vector<16x32xf32>
    %74 = arith.mulf %72, %73 : vector<16x32xf32>
    %75 = vector.broadcast %56 : vector<1x32xf32> to vector<16x32xf32>
    %76 = arith.addf %74, %75 : vector<16x32xf32>
    %c0_37 = arith.constant 0 : index
    %c0_38 = arith.constant 0 : index
    %77 = vector.load %arg9[%c0_37, %c0_38] : memref<32x64xf32, #tpu.memory_space<vmem>>, vector<32x64xf32>
    %cst_39 = arith.constant dense<0.000000e+00> : vector<16x64xf32>
    %78 = tpu.matmul %76, %77, %cst_39 {dimension_numbers = #tpu.dot_dimension_numbers<[1], [0], [0], [1], [0, 0, 1, 1], [], []>} : vector<16x32xf32>, vector<32x64xf32>, vector<16x64xf32> -> vector<16x64xf32>
    %c0_40 = arith.constant 0 : index
    %c0_41 = arith.constant 0 : index
    %79 = vector.load %arg10[%c0_40, %c0_41] : memref<1x64xf32, #tpu.memory_space<vmem>>, vector<1x64xf32>
    %80 = vector.broadcast %79 : vector<1x64xf32> to vector<16x64xf32>
    %81 = arith.addf %78, %80 : vector<16x64xf32>
    %cst_42 = arith.constant 5.000000e-01 : f32
    %82 = vector.broadcast %cst_42 : f32 to vector<16x64xf32>
    %83 = arith.mulf %82, %81 : vector<16x64xf32>
    %cst_43 = arith.constant 0.707106769 : f32
    %84 = vector.broadcast %cst_43 : f32 to vector<16x64xf32>
    %85 = arith.mulf %81, %84 : vector<16x64xf32>
    %cst_44 = arith.constant 0.000000e+00 : f32
    %86 = vector.broadcast %cst_44 : f32 to vector<16x64xf32>
    %87 = arith.cmpf oge, %85, %86 : vector<16x64xf32>
    %cst_45 = arith.constant 1.000000e+00 : f32
    %cst_46 = arith.constant -1.000000e+00 : f32
    %88 = vector.broadcast %cst_45 : f32 to vector<16x64xf32>
    %89 = vector.broadcast %cst_46 : f32 to vector<16x64xf32>
    %90 = arith.select %87, %88, %89 : vector<16x64xi1>, vector<16x64xf32>
    %91 = math.absf %85 : vector<16x64xf32>
    %cst_47 = arith.constant 0.327591091 : f32
    %92 = vector.broadcast %cst_47 : f32 to vector<16x64xf32>
    %93 = arith.mulf %92, %91 : vector<16x64xf32>
    %cst_48 = arith.constant 1.000000e+00 : f32
    %94 = vector.broadcast %cst_48 : f32 to vector<16x64xf32>
    %95 = arith.addf %94, %93 : vector<16x64xf32>
    %cst_49 = arith.constant 1.000000e+00 : f32
    %96 = vector.broadcast %cst_49 : f32 to vector<16x64xf32>
    %97 = arith.divf %96, %95 : vector<16x64xf32>
    %cst_50 = arith.constant 1.06140542 : f32
    %98 = vector.broadcast %cst_50 : f32 to vector<16x64xf32>
    %99 = arith.mulf %98, %97 : vector<16x64xf32>
    %cst_51 = arith.constant -1.45315206 : f32
    %100 = vector.broadcast %cst_51 : f32 to vector<16x64xf32>
    %101 = arith.addf %99, %100 : vector<16x64xf32>
    %102 = arith.mulf %101, %97 : vector<16x64xf32>
    %cst_52 = arith.constant 1.42141378 : f32
    %103 = vector.broadcast %cst_52 : f32 to vector<16x64xf32>
    %104 = arith.addf %102, %103 : vector<16x64xf32>
    %105 = arith.mulf %104, %97 : vector<16x64xf32>
    %cst_53 = arith.constant -0.284496725 : f32
    %106 = vector.broadcast %cst_53 : f32 to vector<16x64xf32>
    %107 = arith.addf %105, %106 : vector<16x64xf32>
    %108 = arith.mulf %107, %97 : vector<16x64xf32>
    %cst_54 = arith.constant 0.254829586 : f32
    %109 = vector.broadcast %cst_54 : f32 to vector<16x64xf32>
    %110 = arith.addf %108, %109 : vector<16x64xf32>
    %111 = arith.mulf %110, %97 : vector<16x64xf32>
    %cst_55 = arith.constant 0.000000e+00 : f32
    %112 = vector.broadcast %cst_55 : f32 to vector<16x64xf32>
    %113 = arith.subf %112, %91 : vector<16x64xf32>
    %114 = arith.mulf %113, %91 : vector<16x64xf32>
    %115 = math.exp %114 : vector<16x64xf32>
    %116 = arith.mulf %111, %115 : vector<16x64xf32>
    %cst_56 = arith.constant 1.000000e+00 : f32
    %117 = vector.broadcast %cst_56 : f32 to vector<16x64xf32>
    %118 = arith.subf %117, %116 : vector<16x64xf32>
    %119 = arith.mulf %90, %118 : vector<16x64xf32>
    %cst_57 = arith.constant 1.000000e+00 : f32
    %120 = vector.broadcast %cst_57 : f32 to vector<16x64xf32>
    %121 = arith.addf %120, %119 : vector<16x64xf32>
    %122 = arith.mulf %83, %121 : vector<16x64xf32>
    %c0_58 = arith.constant 0 : index
    %c0_59 = arith.constant 0 : index
    %123 = vector.load %arg11[%c0_58, %c0_59] : memref<64x32xf32, #tpu.memory_space<vmem>>, vector<64x32xf32>
    %cst_60 = arith.constant dense<0.000000e+00> : vector<16x32xf32>
    %124 = tpu.matmul %122, %123, %cst_60 {dimension_numbers = #tpu.dot_dimension_numbers<[1], [0], [0], [1], [0, 0, 1, 1], [], []>} : vector<16x64xf32>, vector<64x32xf32>, vector<16x32xf32> -> vector<16x32xf32>
    %c0_61 = arith.constant 0 : index
    %c0_62 = arith.constant 0 : index
    %125 = vector.load %arg12[%c0_61, %c0_62] : memref<1x32xf32, #tpu.memory_space<vmem>>, vector<1x32xf32>
    %126 = vector.broadcast %125 : vector<1x32xf32> to vector<16x32xf32>
    %127 = arith.addf %124, %126 : vector<16x32xf32>
    %c0_63 = arith.constant 0 : index
    %c0_64 = arith.constant 0 : index
    %128 = vector.load %arg13[%c0_63, %c0_64] : memref<32x16xf32, #tpu.memory_space<vmem>>, vector<32x16xf32>
    %cst_65 = arith.constant dense<0.000000e+00> : vector<16x16xf32>
    %129 = tpu.matmul %127, %128, %cst_65 {dimension_numbers = #tpu.dot_dimension_numbers<[1], [0], [0], [1], [0, 0, 1, 1], [], []>} : vector<16x32xf32>, vector<32x16xf32>, vector<16x16xf32> -> vector<16x16xf32>
    %c0_66 = arith.constant 0 : index
    %c0_67 = arith.constant 0 : index
    %130 = vector.load %arg14[%c0_66, %c0_67] : memref<1x16xf32, #tpu.memory_space<vmem>>, vector<1x16xf32>
    %131 = vector.broadcast %130 : vector<1x16xf32> to vector<16x16xf32>
    %132 = arith.addf %129, %131 : vector<16x16xf32>
    %cst_68 = arith.constant 5.000000e-01 : f32
    %133 = vector.broadcast %cst_68 : f32 to vector<16x16xf32>
    %134 = arith.mulf %133, %132 : vector<16x16xf32>
    %cst_69 = arith.constant 0.707106769 : f32
    %135 = vector.broadcast %cst_69 : f32 to vector<16x16xf32>
    %136 = arith.mulf %132, %135 : vector<16x16xf32>
    %cst_70 = arith.constant 0.000000e+00 : f32
    %137 = vector.broadcast %cst_70 : f32 to vector<16x16xf32>
    %138 = arith.cmpf oge, %136, %137 : vector<16x16xf32>
    %cst_71 = arith.constant 1.000000e+00 : f32
    %cst_72 = arith.constant -1.000000e+00 : f32
    %139 = vector.broadcast %cst_71 : f32 to vector<16x16xf32>
    %140 = vector.broadcast %cst_72 : f32 to vector<16x16xf32>
    %141 = arith.select %138, %139, %140 : vector<16x16xi1>, vector<16x16xf32>
    %142 = math.absf %136 : vector<16x16xf32>
    %cst_73 = arith.constant 0.327591091 : f32
    %143 = vector.broadcast %cst_73 : f32 to vector<16x16xf32>
    %144 = arith.mulf %143, %142 : vector<16x16xf32>
    %cst_74 = arith.constant 1.000000e+00 : f32
    %145 = vector.broadcast %cst_74 : f32 to vector<16x16xf32>
    %146 = arith.addf %145, %144 : vector<16x16xf32>
    %cst_75 = arith.constant 1.000000e+00 : f32
    %147 = vector.broadcast %cst_75 : f32 to vector<16x16xf32>
    %148 = arith.divf %147, %146 : vector<16x16xf32>
    %cst_76 = arith.constant 1.06140542 : f32
    %149 = vector.broadcast %cst_76 : f32 to vector<16x16xf32>
    %150 = arith.mulf %149, %148 : vector<16x16xf32>
    %cst_77 = arith.constant -1.45315206 : f32
    %151 = vector.broadcast %cst_77 : f32 to vector<16x16xf32>
    %152 = arith.addf %150, %151 : vector<16x16xf32>
    %153 = arith.mulf %152, %148 : vector<16x16xf32>
    %cst_78 = arith.constant 1.42141378 : f32
    %154 = vector.broadcast %cst_78 : f32 to vector<16x16xf32>
    %155 = arith.addf %153, %154 : vector<16x16xf32>
    %156 = arith.mulf %155, %148 : vector<16x16xf32>
    %cst_79 = arith.constant -0.284496725 : f32
    %157 = vector.broadcast %cst_79 : f32 to vector<16x16xf32>
    %158 = arith.addf %156, %157 : vector<16x16xf32>
    %159 = arith.mulf %158, %148 : vector<16x16xf32>
    %cst_80 = arith.constant 0.254829586 : f32
    %160 = vector.broadcast %cst_80 : f32 to vector<16x16xf32>
    %161 = arith.addf %159, %160 : vector<16x16xf32>
    %162 = arith.mulf %161, %148 : vector<16x16xf32>
    %cst_81 = arith.constant 0.000000e+00 : f32
    %163 = vector.broadcast %cst_81 : f32 to vector<16x16xf32>
    %164 = arith.subf %163, %142 : vector<16x16xf32>
    %165 = arith.mulf %164, %142 : vector<16x16xf32>
    %166 = math.exp %165 : vector<16x16xf32>
    %167 = arith.mulf %162, %166 : vector<16x16xf32>
    %cst_82 = arith.constant 1.000000e+00 : f32
    %168 = vector.broadcast %cst_82 : f32 to vector<16x16xf32>
    %169 = arith.subf %168, %167 : vector<16x16xf32>
    %170 = arith.mulf %141, %169 : vector<16x16xf32>
    %cst_83 = arith.constant 1.000000e+00 : f32
    %171 = vector.broadcast %cst_83 : f32 to vector<16x16xf32>
    %172 = arith.addf %171, %170 : vector<16x16xf32>
    %173 = arith.mulf %134, %172 : vector<16x16xf32>
    %c0_84 = arith.constant 0 : index
    %c0_85 = arith.constant 0 : index
    %174 = vector.load %arg15[%c0_84, %c0_85] : memref<16x32xf32, #tpu.memory_space<vmem>>, vector<16x32xf32>
    %cst_86 = arith.constant dense<0.000000e+00> : vector<16x32xf32>
    %175 = tpu.matmul %173, %174, %cst_86 {dimension_numbers = #tpu.dot_dimension_numbers<[1], [0], [0], [1], [0, 0, 1, 1], [], []>} : vector<16x16xf32>, vector<16x32xf32>, vector<16x32xf32> -> vector<16x32xf32>
    %c0_87 = arith.constant 0 : index
    %c0_88 = arith.constant 0 : index
    %176 = vector.load %arg16[%c0_87, %c0_88] : memref<1x32xf32, #tpu.memory_space<vmem>>, vector<1x32xf32>
    %177 = vector.broadcast %176 : vector<1x32xf32> to vector<16x32xf32>
    %178 = arith.addf %175, %177 : vector<16x32xf32>
    %179 = arith.addf %76, %127 : vector<16x32xf32>
    %180 = arith.addf %179, %178 : vector<16x32xf32>
    %c0_89 = arith.constant 0 : index
    %c0_90 = arith.constant 0 : index
    %181 = vector.load %arg17[%c0_89, %c0_90] : memref<1x32xf32, #tpu.memory_space<vmem>>, vector<1x32xf32>
    %c0_91 = arith.constant 0 : index
    %c0_92 = arith.constant 0 : index
    %182 = vector.load %arg18[%c0_91, %c0_92] : memref<1x32xf32, #tpu.memory_space<vmem>>, vector<1x32xf32>
    %cst_93 = arith.constant dense<0.000000e+00> : vector<16xf32>
    %183 = vector.multi_reduction <add>, %180, %cst_93 [1] : vector<16x32xf32> to vector<16xf32>
    %184 = vector.shape_cast %183 : vector<16xf32> to vector<16x1xf32>
    %cst_94 = arith.constant 3.200000e+01 : f32
    %185 = vector.broadcast %cst_94 : f32 to vector<16x1xf32>
    %186 = arith.divf %184, %185 : vector<16x1xf32>
    %187 = vector.broadcast %186 : vector<16x1xf32> to vector<16x32xf32>
    %188 = arith.subf %180, %187 : vector<16x32xf32>
    %189 = arith.mulf %188, %188 : vector<16x32xf32>
    %cst_95 = arith.constant dense<0.000000e+00> : vector<16xf32>
    %190 = vector.multi_reduction <add>, %189, %cst_95 [1] : vector<16x32xf32> to vector<16xf32>
    %191 = vector.shape_cast %190 : vector<16xf32> to vector<16x1xf32>
    %cst_96 = arith.constant 3.200000e+01 : f32
    %192 = vector.broadcast %cst_96 : f32 to vector<16x1xf32>
    %193 = arith.divf %191, %192 : vector<16x1xf32>
    %cst_97 = arith.constant 9.99999974E-6 : f32
    %194 = vector.broadcast %cst_97 : f32 to vector<16x1xf32>
    %195 = arith.addf %193, %194 : vector<16x1xf32>
    %196 = math.rsqrt %195 : vector<16x1xf32>
    %197 = vector.broadcast %196 : vector<16x1xf32> to vector<16x32xf32>
    %198 = arith.mulf %188, %197 : vector<16x32xf32>
    %199 = vector.broadcast %181 : vector<1x32xf32> to vector<16x32xf32>
    %200 = arith.mulf %198, %199 : vector<16x32xf32>
    %201 = vector.broadcast %182 : vector<1x32xf32> to vector<16x32xf32>
    %202 = arith.addf %200, %201 : vector<16x32xf32>
    %c0_98 = arith.constant 0 : index
    %c0_99 = arith.constant 0 : index
    %203 = vector.load %arg19[%c0_98, %c0_99] : memref<16x32xf32, #tpu.memory_space<vmem>>, vector<16x32xf32>
    tpu.vector_store %arg19[%c0_98, %c0_99], %202 {strides = array<i32>} : memref<16x32xf32, #tpu.memory_space<vmem>>, vector<16x32xf32>,
    return
  }
  func.func @transform_0(%arg0: i32) -> (i32, i32) {
    %c0_i32 = arith.constant 0 : i32
    %c0_i32_0 = arith.constant 0 : i32
    return %arg0, %c0_i32 : i32, i32
  }
  func.func @transform_1(%arg0: i32) -> (i32, i32) {
    %c0_i32 = arith.constant 0 : i32
    %c0_i32_0 = arith.constant 0 : i32
    return %arg0, %c0_i32 : i32, i32
  }
  func.func @transform_2(%arg0: i32) -> (i32, i32) {
    %c0_i32 = arith.constant 0 : i32
    %c0_i32_0 = arith.constant 0 : i32
    %c0_i32_1 = arith.constant 0 : i32
    return %c0_i32, %c0_i32_0 : i32, i32
  }
  func.func @transform_3(%arg0: i32) -> (i32, i32) {
    %c0_i32 = arith.constant 0 : i32
    %c0_i32_0 = arith.constant 0 : i32
    %c0_i32_1 = arith.constant 0 : i32
    return %c0_i32, %c0_i32_0 : i32, i32
  }
  func.func @transform_4(%arg0: i32) -> (i32, i32) {
    %c0_i32 = arith.constant 0 : i32
    %c0_i32_0 = arith.constant 0 : i32
    %c0_i32_1 = arith.constant 0 : i32
    return %c0_i32, %c0_i32_0 : i32, i32
  }
  func.func @transform_5(%arg0: i32) -> (i32, i32) {
    %c0_i32 = arith.constant 0 : i32
    %c0_i32_0 = arith.constant 0 : i32
    %c0_i32_1 = arith.constant 0 : i32
    return %c0_i32, %c0_i32_0 : i32, i32
  }
  func.func @transform_6(%arg0: i32) -> (i32, i32) {
    %c0_i32 = arith.constant 0 : i32
    %c0_i32_0 = arith.constant 0 : i32
    %c0_i32_1 = arith.constant 0 : i32
    return %c0_i32, %c0_i32_0 : i32, i32
  }
  func.func @transform_7(%arg0: i32) -> (i32, i32) {
    %c0_i32 = arith.constant 0 : i32
    %c0_i32_0 = arith.constant 0 : i32
    %c0_i32_1 = arith.constant 0 : i32
    return %c0_i32, %c0_i32_0 : i32, i32
  }
  func.func @transform_8(%arg0: i32) -> (i32, i32) {
    %c0_i32 = arith.constant 0 : i32
    %c0_i32_0 = arith.constant 0 : i32
    %c0_i32_1 = arith.constant 0 : i32
    return %c0_i32, %c0_i32_0 : i32, i32
  }
  func.func @transform_9(%arg0: i32) -> (i32, i32) {
    %c0_i32 = arith.constant 0 : i32
    %c0_i32_0 = arith.constant 0 : i32
    %c0_i32_1 = arith.constant 0 : i32
    return %c0_i32, %c0_i32_0 : i32, i32
  }
  func.func @transform_10(%arg0: i32) -> (i32, i32) {
    %c0_i32 = arith.constant 0 : i32
    %c0_i32_0 = arith.constant 0 : i32
    %c0_i32_1 = arith.constant 0 : i32
    return %c0_i32, %c0_i32_0 : i32, i32
  }
  func.func @transform_11(%arg0: i32) -> (i32, i32) {
    %c0_i32 = arith.constant 0 : i32
    %c0_i32_0 = arith.constant 0 : i32
    %c0_i32_1 = arith.constant 0 : i32
    return %c0_i32, %c0_i32_0 : i32, i32
  }
  func.func @transform_12(%arg0: i32) -> (i32, i32) {
    %c0_i32 = arith.constant 0 : i32
    %c0_i32_0 = arith.constant 0 : i32
    %c0_i32_1 = arith.constant 0 : i32
    return %c0_i32, %c0_i32_0 : i32, i32
  }
  func.func @transform_13(%arg0: i32) -> (i32, i32) {
    %c0_i32 = arith.constant 0 : i32
    %c0_i32_0 = arith.constant 0 : i32
    %c0_i32_1 = arith.constant 0 : i32
    return %c0_i32, %c0_i32_0 : i32, i32
  }
  func.func @transform_14(%arg0: i32) -> (i32, i32) {
    %c0_i32 = arith.constant 0 : i32
    %c0_i32_0 = arith.constant 0 : i32
    %c0_i32_1 = arith.constant 0 : i32
    return %c0_i32, %c0_i32_0 : i32, i32
  }
  func.func @transform_15(%arg0: i32) -> (i32, i32) {
    %c0_i32 = arith.constant 0 : i32
    %c0_i32_0 = arith.constant 0 : i32
    %c0_i32_1 = arith.constant 0 : i32
    return %c0_i32, %c0_i32_0 : i32, i32
  }
  func.func @transform_16(%arg0: i32) -> (i32, i32) {
    %c0_i32 = arith.constant 0 : i32
    %c0_i32_0 = arith.constant 0 : i32
    %c0_i32_1 = arith.constant 0 : i32
    return %c0_i32, %c0_i32_0 : i32, i32
  }
  func.func @transform_17(%arg0: i32) -> (i32, i32) {
    %c0_i32 = arith.constant 0 : i32
    %c0_i32_0 = arith.constant 0 : i32
    %c0_i32_1 = arith.constant 0 : i32
    return %c0_i32, %c0_i32_0 : i32, i32
  }
  func.func @transform_18(%arg0: i32) -> (i32, i32) {
    %c0_i32 = arith.constant 0 : i32
    %c0_i32_0 = arith.constant 0 : i32
    return %arg0, %c0_i32 : i32, i32
  }
}

</mosaic_0001>

<llo_original>
// kernel: transformer_encoder_layer.3
$region0: #{transformer_encoder_layer.3}
  #allocation0 [shape = 'u32[]', space=smem, size = 0x4, offset = 0x4, fixed_abs, tag = 'smem constant byte address 0x4 - core index']
  #allocation1 [shape = 'u32[144,128]{1,0:T(1,128)}', space=vmem, size = 0x12000, scoped, tag = 'internal scratch']
  %s0 = inlined_call_operand.vmem [shape: f32[16,32], index: 0, kind: input, shape index: {}]
  %s1 = inlined_call_operand.vmem [shape: f32[16,32], index: 1, kind: input, shape index: {}]
  %s2 = inlined_call_operand.vmem [shape: f32[32,16], index: 2, kind: input, shape index: {}]
  %s3 = inlined_call_operand.vmem [shape: f32[1,16], index: 3, kind: input, shape index: {}]
  %s4 = inlined_call_operand.vmem [shape: f32[16,32], index: 4, kind: input, shape index: {}]
  %s5 = inlined_call_operand.vmem [shape: f32[1,32], index: 5, kind: input, shape index: {}]
  %s6 = inlined_call_operand.vmem [shape: f32[1,32], index: 6, kind: input, shape index: {}]
  %s7 = inlined_call_operand.vmem [shape: f32[1,32], index: 7, kind: input, shape index: {}]
  %s8 = inlined_call_operand.vmem [shape: f32[32,64], index: 8, kind: input, shape index: {}]
  %s9 = inlined_call_operand.vmem [shape: f32[1,64], index: 9, kind: input, shape index: {}]
  %s10 = inlined_call_operand.vmem [shape: f32[64,32], index: 10, kind: input, shape index: {}]
  %s11 = inlined_call_operand.vmem [shape: f32[1,32], index: 11, kind: input, shape index: {}]
  %s12 = inlined_call_operand.vmem [shape: f32[32,16], index: 12, kind: input, shape index: {}]
  %s13 = inlined_call_operand.vmem [shape: f32[1,16], index: 13, kind: input, shape index: {}]
  %s14 = inlined_call_operand.vmem [shape: f32[16,32], index: 14, kind: input, shape index: {}]
  %s15 = inlined_call_operand.vmem [shape: f32[1,32], index: 15, kind: input, shape index: {}]
  %s16 = inlined_call_operand.vmem [shape: f32[1,32], index: 16, kind: input, shape index: {}]
  %s17 = inlined_call_operand.vmem [shape: f32[1,32], index: 17, kind: input, shape index: {}]
  %s18 = inlined_call_operand.vmem [shape: f32[16,32], index: 18, kind: output, shape index: {}]
  %s19 = sld [smem:[#allocation0]]
  $region82: #{transformer_encoder_layer.3} parent=0
    _
  %s21 = ssub.s32 1, %s19
  %s22 = scalar_select 0, %s21, %s19
  // Predicated region
  $region2: #{transformer_encoder_layer.3} parent=0 // pred_check
    _
  $region3: #{transformer_encoder_layer.3} parent=0 // pred_check_branch
    %24 = sbr.rel (0) target = $region5
  $region4: #{transformer_encoder_layer.3} parent=0 // pred_region
    _
  $region5: #{transformer_encoder_layer.3} parent=0 // pred_fallthru
    _
  // Predicated region
  $region6: #{transformer_encoder_layer.3} parent=0 // pred_check
    _
  $region7: #{transformer_encoder_layer.3} parent=0 // pred_check_branch
    %26 = sbr.rel (0) target = $region9
  $region8: #{transformer_encoder_layer.3} parent=0 // pred_region
    _
  $region9: #{transformer_encoder_layer.3} parent=0 // pred_fallthru
    _
  // Predicated region
  $region10: #{transformer_encoder_layer.3} parent=0 // pred_check
    _
  $region11: #{transformer_encoder_layer.3} parent=0 // pred_check_branch
    %28 = sbr.rel (0) target = $region13
  $region12: #{transformer_encoder_layer.3} parent=0 // pred_region
    _
  $region13: #{transformer_encoder_layer.3} parent=0 // pred_fallthru
    _
  // Predicated region
  $region14: #{transformer_encoder_layer.3} parent=0 // pred_check
    _
  $region15: #{transformer_encoder_layer.3} parent=0 // pred_check_branch
    %30 = sbr.rel (0) target = $region17
  $region16: #{transformer_encoder_layer.3} parent=0 // pred_region
    _
  $region17: #{transformer_encoder_layer.3} parent=0 // pred_fallthru
    _
  // Predicated region
  $region18: #{transformer_encoder_layer.3} parent=0 // pred_check
    _
  $region19: #{transformer_encoder_layer.3} parent=0 // pred_check_branch
    %32 = sbr.rel (0) target = $region21
  $region20: #{transformer_encoder_layer.3} parent=0 // pred_region
    _
  $region21: #{transformer_encoder_layer.3} parent=0 // pred_fallthru
    _
  // Predicated region
  $region22: #{transformer_encoder_layer.3} parent=0 // pred_check
    _
  $region23: #{transformer_encoder_layer.3} parent=0 // pred_check_branch
    %34 = sbr.rel (0) target = $region25
  $region24: #{transformer_encoder_layer.3} parent=0 // pred_region
    _
  $region25: #{transformer_encoder_layer.3} parent=0 // pred_fallthru
    _
  // Predicated region
  $region26: #{transformer_encoder_layer.3} parent=0 // pred_check
    _
  $region27: #{transformer_encoder_layer.3} parent=0 // pred_check_branch
    %36 = sbr.rel (0) target = $region29
  $region28: #{transformer_encoder_layer.3} parent=0 // pred_region
    _
  $region29: #{transformer_encoder_layer.3} parent=0 // pred_fallthru
    _
  // Predicated region
  $region30: #{transformer_encoder_layer.3} parent=0 // pred_check
    _
  $region31: #{transformer_encoder_layer.3} parent=0 // pred_check_branch
    %38 = sbr.rel (0) target = $region33
  $region32: #{transformer_encoder_layer.3} parent=0 // pred_region
    _
  $region33: #{transformer_encoder_layer.3} parent=0 // pred_fallthru
    _
  // Predicated region
  $region34: #{transformer_encoder_layer.3} parent=0 // pred_check
    _
  $region35: #{transformer_encoder_layer.3} parent=0 // pred_check_branch
    %40 = sbr.rel (0) target = $region37
  $region36: #{transformer_encoder_layer.3} parent=0 // pred_region
    _
  $region37: #{transformer_encoder_layer.3} parent=0 // pred_fallthru
    _
  // Predicated region
  $region38: #{transformer_encoder_layer.3} parent=0 // pred_check
    _
  $region39: #{transformer_encoder_layer.3} parent=0 // pred_check_branch
    %42 = sbr.rel (0) target = $region41
  $region40: #{transformer_encoder_layer.3} parent=0 // pred_region
    _
  $region41: #{transformer_encoder_layer.3} parent=0 // pred_fallthru
    _
  // Predicated region
  $region42: #{transformer_encoder_layer.3} parent=0 // pred_check
    _
  $region43: #{transformer_encoder_layer.3} parent=0 // pred_check_branch
    %44 = sbr.rel (0) target = $region45
  $region44: #{transformer_encoder_layer.3} parent=0 // pred_region
    _
  $region45: #{transformer_encoder_layer.3} parent=0 // pred_fallthru
    _
  // Predicated region
  $region46: #{transformer_encoder_layer.3} parent=0 // pred_check
    _
  $region47: #{transformer_encoder_layer.3} parent=0 // pred_check_branch
    %46 = sbr.rel (0) target = $region49
  $region48: #{transformer_encoder_layer.3} parent=0 // pred_region
    _
  $region49: #{transformer_encoder_layer.3} parent=0 // pred_fallthru
    _
  // Predicated region
  $region50: #{transformer_encoder_layer.3} parent=0 // pred_check
    _
  $region51: #{transformer_encoder_layer.3} parent=0 // pred_check_branch
    %48 = sbr.rel (0) target = $region53
  $region52: #{transformer_encoder_layer.3} parent=0 // pred_region
    _
  $region53: #{transformer_encoder_layer.3} parent=0 // pred_fallthru
    _
  // Predicated region
  $region54: #{transformer_encoder_layer.3} parent=0 // pred_check
    _
  $region55: #{transformer_encoder_layer.3} parent=0 // pred_check_branch
    %50 = sbr.rel (0) target = $region57
  $region56: #{transformer_encoder_layer.3} parent=0 // pred_region
    _
  $region57: #{transformer_encoder_layer.3} parent=0 // pred_fallthru
    _
  // Predicated region
  $region58: #{transformer_encoder_layer.3} parent=0 // pred_check
    _
  $region59: #{transformer_encoder_layer.3} parent=0 // pred_check_branch
    %52 = sbr.rel (0) target = $region61
  $region60: #{transformer_encoder_layer.3} parent=0 // pred_region
    _
  $region61: #{transformer_encoder_layer.3} parent=0 // pred_fallthru
    _
  // Predicated region
  $region62: #{transformer_encoder_layer.3} parent=0 // pred_check
    _
  $region63: #{transformer_encoder_layer.3} parent=0 // pred_check_branch
    %54 = sbr.rel (0) target = $region65
  $region64: #{transformer_encoder_layer.3} parent=0 // pred_region
    _
  $region65: #{transformer_encoder_layer.3} parent=0 // pred_fallthru
    _
  // Predicated region
  $region66: #{transformer_encoder_layer.3} parent=0 // pred_check
    _
  $region67: #{transformer_encoder_layer.3} parent=0 // pred_check_branch
    %56 = sbr.rel (0) target = $region69
  $region68: #{transformer_encoder_layer.3} parent=0 // pred_region
    _
  $region69: #{transformer_encoder_layer.3} parent=0 // pred_fallthru
    _
  // Predicated region
  $region70: #{transformer_encoder_layer.3} parent=0 // pred_check
    _
  $region71: #{transformer_encoder_layer.3} parent=0 // pred_check_branch
    %58 = sbr.rel (0) target = $region73
  $region72: #{transformer_encoder_layer.3} parent=0 // pred_region
    _
  $region73: #{transformer_encoder_layer.3} parent=0 // pred_fallthru
    _
  %v59 = vld [vmem:[%s0] sm:$0xff]
  %v60 = vld [vmem:[%s0 + $0x8] sm:$0xff]
  %v61 = vld [vmem:[%s1] sm:$0xff]
  %v62 = vld [vmem:[%s1 + $0x8] sm:$0xff]
  %v63 = vld [vmem:[%s2] sm:$0xff]
  %v64 = vld [vmem:[%s2 + $0x8] sm:$0xff]
  %v65 = vld [vmem:[%s2 + $0x10] sm:$0xff]
  %v66 = vld [vmem:[%s2 + $0x18] sm:$0xff]
  %v67 = vld [vmem:[%s3] sm:$0x1]
  %v69 = vlaneseq
  %v70 = vshrl.u32 %v69, 7
  %v71 = vsub.s32 0, %v70
  %v72 = vrot.slane %v67, %v71
  %vm74 = vcmask 261120
  %v76 = vsel %vm74, %v61, 0
  %v79 = vsel %vm74, %v62, 0
  %81 = vmatprep.subr.mxu0 0.0
  %82 = vmatpush1.msra.mxu0 0.0
  %83 = vmatprep.subr.mxu0 0.0
  %84 = vmatpush1.msra.mxu0 0.0
  %85 = vmatprep.subr.mxu0 0.0
  %86 = vmatpush1.msra.mxu0 0.0
  %87 = vmatprep.subr.mxu0 0.0
  %88 = vmatpush1.msra.mxu0 0.0
  %89 = vmatprep.subr.mxu0 0.0
  %90 = vmatpush1.msra.mxu0 0.0
  %91 = vmatprep.subr.mxu0 0.0
  %92 = vmatpush1.msra.mxu0 0.0
  %93 = vmatprep.subr.mxu0 0.0
  %94 = vmatpush1.msra.mxu0 0.0
  %95 = vmatprep.subr.mxu0 0.0
  %96 = vmatpush1.msra.mxu0 0.0
  %97 = vmatprep.subr.mxu0 0.0
  %98 = vmatpush1.msra.mxu0 0.0
  %99 = vmatprep.subr.mxu0 0.0
  %100 = vmatpush1.msra.mxu0 0.0
  %101 = vmatprep.subr.mxu0 0.0
  %102 = vmatpush1.msra.mxu0 0.0
  %103 = vmatprep.subr.mxu0 0.0
  %104 = vmatpush1.msra.mxu0 0.0
  %105 = vmatprep.subr.mxu0 0.0
  %106 = vmatpush1.msra.mxu0 %v66
  %107 = vmatprep.subr.mxu0 0.0
  %108 = vmatpush1.msra.mxu0 %v65
  %109 = vmatprep.subr.mxu0 0.0
  %110 = vmatpush1.msra.mxu0 %v64
  %111 = vmatprep.subr.mxu0 0.0
  %112 = vmatpush1.msra.mxu0 %v63
  %113 = vmatprep.subr.mxu0 0.0
  %114 = vmatpush2.msra.mxu0 0.0
  %115 = vmatprep.subr.mxu0 0.0
  %116 = vmatpush2.msra.mxu0 0.0
  %117 = vmatprep.subr.mxu0 0.0
  %118 = vmatpush2.msra.mxu0 0.0
  %119 = vmatprep.subr.mxu0 0.0
  %120 = vmatpush2.msra.mxu0 0.0
  %121 = vmatprep.subr.mxu0 0.0
  %122 = vmatpush2.msra.mxu0 0.0
  %123 = vmatprep.subr.mxu0 0.0
  %124 = vmatpush2.msra.mxu0 0.0
  %125 = vmatprep.subr.mxu0 0.0
  %126 = vmatpush2.msra.mxu0 0.0
  %127 = vmatprep.subr.mxu0 0.0
  %128 = vmatpush2.msra.mxu0 0.0
  %129 = vmatprep.subr.mxu0 0.0
  %130 = vmatpush2.msra.mxu0 0.0
  %131 = vmatprep.subr.mxu0 0.0
  %132 = vmatpush2.msra.mxu0 0.0
  %133 = vmatprep.subr.mxu0 0.0
  %134 = vmatpush2.msra.mxu0 0.0
  %135 = vmatprep.subr.mxu0 0.0
  %136 = vmatpush2.msra.mxu0 0.0
  %137 = vmatprep.subr.mxu0 0.0
  %138 = vmatpush2.msra.mxu0 0.0
  %139 = vmatprep.subr.mxu0 0.0
  %140 = vmatpush2.msra.mxu0 0.0
  %141 = vmatprep.subr.mxu0 0.0
  %142 = vmatpush2.msra.mxu0 0.0
  %143 = vmatprep.subr.mxu0 0.0
  %144 = vmatpush2.msra.mxu0 0.0
  %145 = vmatprep.mubr.f32.mxu0 0.0
  %146 = vmatmul.mubr.f32.gmra.mxu0 %v76
  %v147 = vpop.f32.mrf.mxu0
  %v148 = vadd.f32 %v72, %v147
  %v149 = vpop.f32.mrf.mxu0
  %150 = vmatprep.mubr.f32.mxu0 0.0
  %151 = vmatmul.mubr.f32.gmra.mxu0 %v79
  %v152 = vpop.f32.mrf.mxu0
  %v153 = vadd.f32 %v72, %v152
  %v154 = vpop.f32.mrf.mxu0
  %155 = vdwg.mxu0
  %v156 = vmul.f32 %v148, 0.5
  %v157 = vmul.f32 %v153, 0.5
  %v158 = vmul.f32 %v148, 0.70710677
  %v159 = vmul.f32 %v153, 0.70710677
  %vm160 = vcmp.ge.f32.partialorder %v158, 0.0
  %vm161 = vcmp.ge.f32.partialorder %v159, 0.0
  %v162 = vsel %vm160, 1.0, -1.0
  %v163 = vsel %vm161, 1.0, -1.0
  %v164 = vand.u32 2147483647, %v158
  %v165 = vand.u32 2147483647, %v159
  %v166 = vmul.f32 %v164, 0.3275911
  %v167 = vmul.f32 %v165, 0.3275911
  %v168 = vadd.f32 %v166, 1.0
  %v169 = vadd.f32 %v167, 1.0
  %v170 = vrcp.pop %v168
  %v171 = vmul.f32 1.0, %v170
  %v172 = vrcp.pop %v169
  %v173 = vmul.f32 1.0, %v172
  %v174 = vmul.f32 %v171, 1.0614054
  %v175 = vmul.f32 %v173, 1.0614054
  %v176 = vadd.f32 %v174, -1.4531521
  %v177 = vadd.f32 %v175, -1.4531521
  %v178 = vmul.f32 %v176, %v171
  %v179 = vmul.f32 %v177, %v173
  %v180 = vadd.f32 %v178, 1.4214138
  %v181 = vadd.f32 %v179, 1.4214138
  %v182 = vmul.f32 %v180, %v171
  %v183 = vmul.f32 %v181, %v173
  %v184 = vadd.f32 %v182, -0.28449672
  %v185 = vadd.f32 %v183, -0.28449672
  %v186 = vmul.f32 %v184, %v171
  %v187 = vmul.f32 %v185, %v173
  %v188 = vadd.f32 %v186, 0.2548296
  %v189 = vadd.f32 %v187, 0.2548296
  %v190 = vmul.f32 %v188, %v171
  %v191 = vmul.f32 %v189, %v173
  %v192 = vsub.f32 0.0, %v164
  %v193 = vsub.f32 0.0, %v165
  %v194 = vmul.f32 %v192, %v164
  %v195 = vmul.f32 %v193, %v165
  %v196 = vmul.f32 %v194, 1.442695
  %v197 = vpow.pop %v196
  %v198 = vmul.f32 %v195, 1.442695
  %v199 = vpow.pop %v198
  %v200 = vmul.f32 %v190, %v197
  %v201 = vmul.f32 %v191, %v199
  %v202 = vsub.f32 1.0, %v200
  %v203 = vsub.f32 1.0, %v201
  %v204 = vmul.f32 %v162, %v202
  %v205 = vmul.f32 %v163, %v203
  %v206 = vadd.f32 %v204, 1.0
  %v207 = vadd.f32 %v205, 1.0
  %v208 = vmul.f32 %v156, %v206
  %v209 = vmul.f32 %v157, %v207
  %v210 = vld [vmem:[%s4] sm:$0xff]
  %v211 = vld [vmem:[%s4 + $0x8] sm:$0xff]
  %v212 = vld [vmem:[%s5] sm:$0x1]
  %v214 = vlaneseq
  %v215 = vshrl.u32 %v214, 7
  %v216 = vsub.s32 0, %v215
  %v217 = vrot.slane %v212, %v216
  %vm219 = vcmask 130048
  %v221 = vsel %vm219, %v208, 0
  %v224 = vsel %vm219, %v209, 0
  %226 = vmatprep.subr.mxu0 0.0
  %227 = vmatpush1.msra.mxu0 0.0
  %228 = vmatprep.subr.mxu0 0.0
  %229 = vmatpush1.msra.mxu0 0.0
  %230 = vmatprep.subr.mxu0 0.0
  %231 = vmatpush1.msra.mxu0 0.0
  %232 = vmatprep.subr.mxu0 0.0
  %233 = vmatpush1.msra.mxu0 0.0
  %234 = vmatprep.subr.mxu0 0.0
  %235 = vmatpush1.msra.mxu0 0.0
  %236 = vmatprep.subr.mxu0 0.0
  %237 = vmatpush1.msra.mxu0 0.0
  %238 = vmatprep.subr.mxu0 0.0
  %239 = vmatpush1.msra.mxu0 0.0
  %240 = vmatprep.subr.mxu0 0.0
  %241 = vmatpush1.msra.mxu0 0.0
  %242 = vmatprep.subr.mxu0 0.0
  %243 = vmatpush1.msra.mxu0 0.0
  %244 = vmatprep.subr.mxu0 0.0
  %245 = vmatpush1.msra.mxu0 0.0
  %246 = vmatprep.subr.mxu0 0.0
  %247 = vmatpush1.msra.mxu0 0.0
  %248 = vmatprep.subr.mxu0 0.0
  %249 = vmatpush1.msra.mxu0 0.0
  %250 = vmatprep.subr.mxu0 0.0
  %251 = vmatpush1.msra.mxu0 0.0
  %252 = vmatprep.subr.mxu0 0.0
  %253 = vmatpush1.msra.mxu0 0.0
  %254 = vmatprep.subr.mxu0 0.0
  %255 = vmatpush1.msra.mxu0 %v211
  %256 = vmatprep.subr.mxu0 0.0
  %257 = vmatpush1.msra.mxu0 %v210
  %258 = vmatprep.subr.mxu0 0.0
  %259 = vmatpush2.msra.mxu0 0.0
  %260 = vmatprep.subr.mxu0 0.0
  %261 = vmatpush2.msra.mxu0 0.0
  %262 = vmatprep.subr.mxu0 0.0
  %263 = vmatpush2.msra.mxu0 0.0
  %264 = vmatprep.subr.mxu0 0.0
  %265 = vmatpush2.msra.mxu0 0.0
  %266 = vmatprep.subr.mxu0 0.0
  %267 = vmatpush2.msra.mxu0 0.0
  %268 = vmatprep.subr.mxu0 0.0
  %269 = vmatpush2.msra.mxu0 0.0
  %270 = vmatprep.subr.mxu0 0.0
  %271 = vmatpush2.msra.mxu0 0.0
  %272 = vmatprep.subr.mxu0 0.0
  %273 = vmatpush2.msra.mxu0 0.0
  %274 = vmatprep.subr.mxu0 0.0
  %275 = vmatpush2.msra.mxu0 0.0
  %276 = vmatprep.subr.mxu0 0.0
  %277 = vmatpush2.msra.mxu0 0.0
  %278 = vmatprep.subr.mxu0 0.0
  %279 = vmatpush2.msra.mxu0 0.0
  %280 = vmatprep.subr.mxu0 0.0
  %281 = vmatpush2.msra.mxu0 0.0
  %282 = vmatprep.subr.mxu0 0.0
  %283 = vmatpush2.msra.mxu0 0.0
  %284 = vmatprep.subr.mxu0 0.0
  %285 = vmatpush2.msra.mxu0 0.0
  %286 = vmatprep.subr.mxu0 0.0
  %287 = vmatpush2.msra.mxu0 0.0
  %288 = vmatprep.subr.mxu0 0.0
  %289 = vmatpush2.msra.mxu0 0.0
  %290 = vmatprep.mubr.f32.mxu0 0.0
  %291 = vmatmul.mubr.f32.gmra.mxu0 %v221
  %v292 = vpop.f32.mrf.mxu0
  %v293 = vadd.f32 %v217, %v292
  %v294 = vpop.f32.mrf.mxu0
  %295 = vmatprep.mubr.f32.mxu0 0.0
  %296 = vmatmul.mubr.f32.gmra.mxu0 %v224
  %v297 = vpop.f32.mrf.mxu0
  %v298 = vadd.f32 %v217, %v297
  %v299 = vpop.f32.mrf.mxu0
  %300 = vdwg.mxu0
  %v301 = vadd.f32 %v59, %v61
  %v302 = vadd.f32 %v60, %v62
  %v303 = vadd.f32 %v301, %v293
  %v304 = vadd.f32 %v302, %v298
  %v305 = vld [vmem:[%s6] sm:$0x1]
  %v306 = vld [vmem:[%s7] sm:$0x1]
  %v307 = vsel %vm74, %v303, 0.0
  %308 = vadd.xlane.f32.xlu0 %v307
  %v309 = vpop.xlane.xlu0 %308
  %v310 = vsel %vm74, %v304, 0.0
  %311 = vadd.xlane.f32.xlu0 %v310
  %v312 = vpop.xlane.xlu0 %311
  %v313 = vrcp.pop 32.0
  %v314 = vmul.f32 %v309, %v313
  %v315 = vmul.f32 %v312, %v313
  %v316 = vsub.f32 %v303, %v314
  %v317 = vsub.f32 %v304, %v315
  %v318 = vmul.f32 %v316, %v316
  %v319 = vmul.f32 %v317, %v317
  %v320 = vsel %vm74, %v318, 0.0
  %321 = vadd.xlane.f32.xlu0 %v320
  %v322 = vpop.xlane.xlu0 %321
  %v323 = vsel %vm74, %v319, 0.0
  %324 = vadd.xlane.f32.xlu0 %v323
  %v325 = vpop.xlane.xlu0 %324
  %v326 = vmul.f32 %v322, %v313
  %v327 = vmul.f32 %v325, %v313
  %v328 = vadd.f32 %v326, 1e-05
  %v329 = vadd.f32 %v327, 1e-05
  %v330 = vrsqrt.pop %v328
  %v331 = vrsqrt.pop %v329
  %v332 = vmul.f32 %v316, %v330
  %v333 = vmul.f32 %v317, %v331
  %v335 = vlaneseq
  %v336 = vshrl.u32 %v335, 7
  %v337 = vsub.s32 0, %v336
  %v338 = vrot.slane %v305, %v337
  %v340 = vmul.f32 %v332, %v338
  %v341 = vmul.f32 %v333, %v338
  %v343 = vlaneseq
  %v344 = vshrl.u32 %v343, 7
  %v345 = vsub.s32 0, %v344
  %v346 = vrot.slane %v306, %v345
  %v348 = vadd.f32 %v340, %v346
  %v349 = vadd.f32 %v341, %v346
  %v350 = vld [vmem:[%s8] sm:$0xff]
  %v351 = vld [vmem:[%s8 + $0x8] sm:$0xff]
  %v352 = vld [vmem:[%s8 + $0x10] sm:$0xff]
  %v353 = vld [vmem:[%s8 + $0x18] sm:$0xff]
  %v354 = vld [vmem:[%s9] sm:$0x1]
  %v356 = vlaneseq
  %v357 = vshrl.u32 %v356, 7
  %v358 = vsub.s32 0, %v357
  %v359 = vrot.slane %v354, %v358
  %v362 = vsel %vm74, %v348, 0
  %v365 = vsel %vm74, %v349, 0
  %367 = vmatprep.subr.mxu0 0.0
  %368 = vmatpush1.msra.mxu0 0.0
  %369 = vmatprep.subr.mxu0 0.0
  %370 = vmatpush1.msra.mxu0 0.0
  %371 = vmatprep.subr.mxu0 0.0
  %372 = vmatpush1.msra.mxu0 0.0
  %373 = vmatprep.subr.mxu0 0.0
  %374 = vmatpush1.msra.mxu0 0.0
  %375 = vmatprep.subr.mxu0 0.0
  %376 = vmatpush1.msra.mxu0 0.0
  %377 = vmatprep.subr.mxu0 0.0
  %378 = vmatpush1.msra.mxu0 0.0
  %379 = vmatprep.subr.mxu0 0.0
  %380 = vmatpush1.msra.mxu0 0.0
  %381 = vmatprep.subr.mxu0 0.0
  %382 = vmatpush1.msra.mxu0 0.0
  %383 = vmatprep.subr.mxu0 0.0
  %384 = vmatpush1.msra.mxu0 0.0
  %385 = vmatprep.subr.mxu0 0.0
  %386 = vmatpush1.msra.mxu0 0.0
  %387 = vmatprep.subr.mxu0 0.0
  %388 = vmatpush1.msra.mxu0 0.0
  %389 = vmatprep.subr.mxu0 0.0
  %390 = vmatpush1.msra.mxu0 0.0
  %391 = vmatprep.subr.mxu0 0.0
  %392 = vmatpush1.msra.mxu0 %v353
  %393 = vmatprep.subr.mxu0 0.0
  %394 = vmatpush1.msra.mxu0 %v352
  %395 = vmatprep.subr.mxu0 0.0
  %396 = vmatpush1.msra.mxu0 %v351
  %397 = vmatprep.subr.mxu0 0.0
  %398 = vmatpush1.msra.mxu0 %v350
  %399 = vmatprep.subr.mxu0 0.0
  %400 = vmatpush2.msra.mxu0 0.0
  %401 = vmatprep.subr.mxu0 0.0
  %402 = vmatpush2.msra.mxu0 0.0
  %403 = vmatprep.subr.mxu0 0.0
  %404 = vmatpush2.msra.mxu0 0.0
  %405 = vmatprep.subr.mxu0 0.0
  %406 = vmatpush2.msra.mxu0 0.0
  %407 = vmatprep.subr.mxu0 0.0
  %408 = vmatpush2.msra.mxu0 0.0
  %409 = vmatprep.subr.mxu0 0.0
  %410 = vmatpush2.msra.mxu0 0.0
  %411 = vmatprep.subr.mxu0 0.0
  %412 = vmatpush2.msra.mxu0 0.0
  %413 = vmatprep.subr.mxu0 0.0
  %414 = vmatpush2.msra.mxu0 0.0
  %415 = vmatprep.subr.mxu0 0.0
  %416 = vmatpush2.msra.mxu0 0.0
  %417 = vmatprep.subr.mxu0 0.0
  %418 = vmatpush2.msra.mxu0 0.0
  %419 = vmatprep.subr.mxu0 0.0
  %420 = vmatpush2.msra.mxu0 0.0
  %421 = vmatprep.subr.mxu0 0.0
  %422 = vmatpush2.msra.mxu0 0.0
  %423 = vmatprep.subr.mxu0 0.0
  %424 = vmatpush2.msra.mxu0 0.0
  %425 = vmatprep.subr.mxu0 0.0
  %426 = vmatpush2.msra.mxu0 0.0
  %427 = vmatprep.subr.mxu0 0.0
  %428 = vmatpush2.msra.mxu0 0.0
  %429 = vmatprep.subr.mxu0 0.0
  %430 = vmatpush2.msra.mxu0 0.0
  %431 = vmatprep.mubr.f32.mxu0 0.0
  %432 = vmatmul.mubr.f32.gmra.mxu0 %v362
  %v433 = vpop.f32.mrf.mxu0
  %v434 = vadd.f32 %v359, %v433
  %v435 = vpop.f32.mrf.mxu0
  %436 = vmatprep.mubr.f32.mxu0 0.0
  %437 = vmatmul.mubr.f32.gmra.mxu0 %v365
  %v438 = vpop.f32.mrf.mxu0
  %v439 = vadd.f32 %v359, %v438
  %v440 = vpop.f32.mrf.mxu0
  %441 = vdwg.mxu0
  %v442 = vmul.f32 %v434, 0.5
  %v443 = vmul.f32 %v439, 0.5
  %v444 = vmul.f32 %v434, 0.70710677
  %v445 = vmul.f32 %v439, 0.70710677
  %vm446 = vcmp.ge.f32.partialorder %v444, 0.0
  %vm447 = vcmp.ge.f32.partialorder %v445, 0.0
  %v448 = vsel %vm446, 1.0, -1.0
  %v449 = vsel %vm447, 1.0, -1.0
  %v450 = vand.u32 2147483647, %v444
  %v451 = vand.u32 2147483647, %v445
  %v452 = vmul.f32 %v450, 0.3275911
  %v453 = vmul.f32 %v451, 0.3275911
  %v454 = vadd.f32 %v452, 1.0
  %v455 = vadd.f32 %v453, 1.0
  %v456 = vrcp.pop %v454
  %v457 = vmul.f32 1.0, %v456
  %v458 = vrcp.pop %v455
  %v459 = vmul.f32 1.0, %v458
  %v460 = vmul.f32 %v457, 1.0614054
  %v461 = vmul.f32 %v459, 1.0614054
  %v462 = vadd.f32 %v460, -1.4531521
  %v463 = vadd.f32 %v461, -1.4531521
  %v464 = vmul.f32 %v462, %v457
  %v465 = vmul.f32 %v463, %v459
  %v466 = vadd.f32 %v464, 1.4214138
  %v467 = vadd.f32 %v465, 1.4214138
  %v468 = vmul.f32 %v466, %v457
  %v469 = vmul.f32 %v467, %v459
  %v470 = vadd.f32 %v468, -0.28449672
  %v471 = vadd.f32 %v469, -0.28449672
  %v472 = vmul.f32 %v470, %v457
  %v473 = vmul.f32 %v471, %v459
  %v474 = vadd.f32 %v472, 0.2548296
  %v475 = vadd.f32 %v473, 0.2548296
  %v476 = vmul.f32 %v474, %v457
  %v477 = vmul.f32 %v475, %v459
  %v478 = vsub.f32 0.0, %v450
  %v479 = vsub.f32 0.0, %v451
  %v480 = vmul.f32 %v478, %v450
  %v481 = vmul.f32 %v479, %v451
  %v482 = vmul.f32 %v480, 1.442695
  %v483 = vpow.pop %v482
  %v484 = vmul.f32 %v481, 1.442695
  %v485 = vpow.pop %v484
  %v486 = vmul.f32 %v476, %v483
  %v487 = vmul.f32 %v477, %v485
  %v488 = vsub.f32 1.0, %v486
  %v489 = vsub.f32 1.0, %v487
  %v490 = vmul.f32 %v448, %v488
  %v491 = vmul.f32 %v449, %v489
  %v492 = vadd.f32 %v490, 1.0
  %v493 = vadd.f32 %v491, 1.0
  %v494 = vmul.f32 %v442, %v492
  %v495 = vmul.f32 %v443, %v493
  %v496 = vld [vmem:[%s10] sm:$0xff]
  %v497 = vld [vmem:[%s10 + $0x8] sm:$0xff]
  %v498 = vld [vmem:[%s10 + $0x10] sm:$0xff]
  %v499 = vld [vmem:[%s10 + $0x18] sm:$0xff]
  %v500 = vld [vmem:[%s10 + $0x20] sm:$0xff]
  %v501 = vld [vmem:[%s10 + $0x28] sm:$0xff]
  %v502 = vld [vmem:[%s10 + $0x30] sm:$0xff]
  %v503 = vld [vmem:[%s10 + $0x38] sm:$0xff]
  %v504 = vld [vmem:[%s11] sm:$0x1]
  %v506 = vlaneseq
  %v507 = vshrl.u32 %v506, 7
  %v508 = vsub.s32 0, %v507
  %v509 = vrot.slane %v504, %v508
  %vm511 = vcmask 523264
  %v513 = vsel %vm511, %v494, 0
  %v516 = vsel %vm511, %v495, 0
  %518 = vmatprep.subr.mxu0 0.0
  %519 = vmatpush1.msra.mxu0 0.0
  %520 = vmatprep.subr.mxu0 0.0
  %521 = vmatpush1.msra.mxu0 0.0
  %522 = vmatprep.subr.mxu0 0.0
  %523 = vmatpush1.msra.mxu0 0.0
  %524 = vmatprep.subr.mxu0 0.0
  %525 = vmatpush1.msra.mxu0 0.0
  %526 = vmatprep.subr.mxu0 0.0
  %527 = vmatpush1.msra.mxu0 0.0
  %528 = vmatprep.subr.mxu0 0.0
  %529 = vmatpush1.msra.mxu0 0.0
  %530 = vmatprep.subr.mxu0 0.0
  %531 = vmatpush1.msra.mxu0 0.0
  %532 = vmatprep.subr.mxu0 0.0
  %533 = vmatpush1.msra.mxu0 0.0
  %534 = vmatprep.subr.mxu0 0.0
  %535 = vmatpush1.msra.mxu0 %v503
  %536 = vmatprep.subr.mxu0 0.0
  %537 = vmatpush1.msra.mxu0 %v502
  %538 = vmatprep.subr.mxu0 0.0
  %539 = vmatpush1.msra.mxu0 %v501
  %540 = vmatprep.subr.mxu0 0.0
  %541 = vmatpush1.msra.mxu0 %v500
  %542 = vmatprep.subr.mxu0 0.0
  %543 = vmatpush1.msra.mxu0 %v499
  %544 = vmatprep.subr.mxu0 0.0
  %545 = vmatpush1.msra.mxu0 %v498
  %546 = vmatprep.subr.mxu0 0.0
  %547 = vmatpush1.msra.mxu0 %v497
  %548 = vmatprep.subr.mxu0 0.0
  %549 = vmatpush1.msra.mxu0 %v496
  %550 = vmatprep.subr.mxu0 0.0
  %551 = vmatpush2.msra.mxu0 0.0
  %552 = vmatprep.subr.mxu0 0.0
  %553 = vmatpush2.msra.mxu0 0.0
  %554 = vmatprep.subr.mxu0 0.0
  %555 = vmatpush2.msra.mxu0 0.0
  %556 = vmatprep.subr.mxu0 0.0
  %557 = vmatpush2.msra.mxu0 0.0
  %558 = vmatprep.subr.mxu0 0.0
  %559 = vmatpush2.msra.mxu0 0.0
  %560 = vmatprep.subr.mxu0 0.0
  %561 = vmatpush2.msra.mxu0 0.0
  %562 = vmatprep.subr.mxu0 0.0
  %563 = vmatpush2.msra.mxu0 0.0
  %564 = vmatprep.subr.mxu0 0.0
  %565 = vmatpush2.msra.mxu0 0.0
  %566 = vmatprep.subr.mxu0 0.0
  %567 = vmatpush2.msra.mxu0 0.0
  %568 = vmatprep.subr.mxu0 0.0
  %569 = vmatpush2.msra.mxu0 0.0
  %570 = vmatprep.subr.mxu0 0.0
  %571 = vmatpush2.msra.mxu0 0.0
  %572 = vmatprep.subr.mxu0 0.0
  %573 = vmatpush2.msra.mxu0 0.0
  %574 = vmatprep.subr.mxu0 0.0
  %575 = vmatpush2.msra.mxu0 0.0
  %576 = vmatprep.subr.mxu0 0.0
  %577 = vmatpush2.msra.mxu0 0.0
  %578 = vmatprep.subr.mxu0 0.0
  %579 = vmatpush2.msra.mxu0 0.0
  %580 = vmatprep.subr.mxu0 0.0
  %581 = vmatpush2.msra.mxu0 0.0
  %582 = vmatprep.mubr.f32.mxu0 0.0
  %583 = vmatmul.mubr.f32.gmra.mxu0 %v513
  %v584 = vpop.f32.mrf.mxu0
  %v585 = vadd.f32 %v509, %v584
  %v586 = vpop.f32.mrf.mxu0
  %587 = vmatprep.mubr.f32.mxu0 0.0
  %588 = vmatmul.mubr.f32.gmra.mxu0 %v516
  %v589 = vpop.f32.mrf.mxu0
  %v590 = vadd.f32 %v509, %v589
  %v591 = vpop.f32.mrf.mxu0
  %592 = vdwg.mxu0
  %v593 = vld [vmem:[%s12] sm:$0xff]
  %v594 = vld [vmem:[%s12 + $0x8] sm:$0xff]
  %v595 = vld [vmem:[%s12 + $0x10] sm:$0xff]
  %v596 = vld [vmem:[%s12 + $0x18] sm:$0xff]
  %v597 = vld [vmem:[%s13] sm:$0x1]
  %v599 = vlaneseq
  %v600 = vshrl.u32 %v599, 7
  %v601 = vsub.s32 0, %v600
  %v602 = vrot.slane %v597, %v601
  %v605 = vsel %vm74, %v585, 0
  %v608 = vsel %vm74, %v590, 0
  %610 = vmatprep.subr.mxu0 0.0
  %611 = vmatpush1.msra.mxu0 0.0
  %612 = vmatprep.subr.mxu0 0.0
  %613 = vmatpush1.msra.mxu0 0.0
  %614 = vmatprep.subr.mxu0 0.0
  %615 = vmatpush1.msra.mxu0 0.0
  %616 = vmatprep.subr.mxu0 0.0
  %617 = vmatpush1.msra.mxu0 0.0
  %618 = vmatprep.subr.mxu0 0.0
  %619 = vmatpush1.msra.mxu0 0.0
  %620 = vmatprep.subr.mxu0 0.0
  %621 = vmatpush1.msra.mxu0 0.0
  %622 = vmatprep.subr.mxu0 0.0
  %623 = vmatpush1.msra.mxu0 0.0
  %624 = vmatprep.subr.mxu0 0.0
  %625 = vmatpush1.msra.mxu0 0.0
  %626 = vmatprep.subr.mxu0 0.0
  %627 = vmatpush1.msra.mxu0 0.0
  %628 = vmatprep.subr.mxu0 0.0
  %629 = vmatpush1.msra.mxu0 0.0
  %630 = vmatprep.subr.mxu0 0.0
  %631 = vmatpush1.msra.mxu0 0.0
  %632 = vmatprep.subr.mxu0 0.0
  %633 = vmatpush1.msra.mxu0 0.0
  %634 = vmatprep.subr.mxu0 0.0
  %635 = vmatpush1.msra.mxu0 %v596
  %636 = vmatprep.subr.mxu0 0.0
  %637 = vmatpush1.msra.mxu0 %v595
  %638 = vmatprep.subr.mxu0 0.0
  %639 = vmatpush1.msra.mxu0 %v594
  %640 = vmatprep.subr.mxu0 0.0
  %641 = vmatpush1.msra.mxu0 %v593
  %642 = vmatprep.subr.mxu0 0.0
  %643 = vmatpush2.msra.mxu0 0.0
  %644 = vmatprep.subr.mxu0 0.0
  %645 = vmatpush2.msra.mxu0 0.0
  %646 = vmatprep.subr.mxu0 0.0
  %647 = vmatpush2.msra.mxu0 0.0
  %648 = vmatprep.subr.mxu0 0.0
  %649 = vmatpush2.msra.mxu0 0.0
  %650 = vmatprep.subr.mxu0 0.0
  %651 = vmatpush2.msra.mxu0 0.0
  %652 = vmatprep.subr.mxu0 0.0
  %653 = vmatpush2.msra.mxu0 0.0
  %654 = vmatprep.subr.mxu0 0.0
  %655 = vmatpush2.msra.mxu0 0.0
  %656 = vmatprep.subr.mxu0 0.0
  %657 = vmatpush2.msra.mxu0 0.0
  %658 = vmatprep.subr.mxu0 0.0
  %659 = vmatpush2.msra.mxu0 0.0
  %660 = vmatprep.subr.mxu0 0.0
  %661 = vmatpush2.msra.mxu0 0.0
  %662 = vmatprep.subr.mxu0 0.0
  %663 = vmatpush2.msra.mxu0 0.0
  %664 = vmatprep.subr.mxu0 0.0
  %665 = vmatpush2.msra.mxu0 0.0
  %666 = vmatprep.subr.mxu0 0.0
  %667 = vmatpush2.msra.mxu0 0.0
  %668 = vmatprep.subr.mxu0 0.0
  %669 = vmatpush2.msra.mxu0 0.0
  %670 = vmatprep.subr.mxu0 0.0
  %671 = vmatpush2.msra.mxu0 0.0
  %672 = vmatprep.subr.mxu0 0.0
  %673 = vmatpush2.msra.mxu0 0.0
  %674 = vmatprep.mubr.f32.mxu0 0.0
  %675 = vmatmul.mubr.f32.gmra.mxu0 %v605
  %v676 = vpop.f32.mrf.mxu0
  %v677 = vadd.f32 %v602, %v676
  %v678 = vpop.f32.mrf.mxu0
  %679 = vmatprep.mubr.f32.mxu0 0.0
  %680 = vmatmul.mubr.f32.gmra.mxu0 %v608
  %v681 = vpop.f32.mrf.mxu0
  %v682 = vadd.f32 %v602, %v681
  %v683 = vpop.f32.mrf.mxu0
  %684 = vdwg.mxu0
  %v685 = vmul.f32 %v677, 0.5
  %v686 = vmul.f32 %v682, 0.5
  %v687 = vmul.f32 %v677, 0.70710677
  %v688 = vmul.f32 %v682, 0.70710677
  %vm689 = vcmp.ge.f32.partialorder %v687, 0.0
  %vm690 = vcmp.ge.f32.partialorder %v688, 0.0
  %v691 = vsel %vm689, 1.0, -1.0
  %v692 = vsel %vm690, 1.0, -1.0
  %v693 = vand.u32 2147483647, %v687
  %v694 = vand.u32 2147483647, %v688
  %v695 = vmul.f32 %v693, 0.3275911
  %v696 = vmul.f32 %v694, 0.3275911
  %v697 = vadd.f32 %v695, 1.0
  %v698 = vadd.f32 %v696, 1.0
  %v699 = vrcp.pop %v697
  %v700 = vmul.f32 1.0, %v699
  %v701 = vrcp.pop %v698
  %v702 = vmul.f32 1.0, %v701
  %v703 = vmul.f32 %v700, 1.0614054
  %v704 = vmul.f32 %v702, 1.0614054
  %v705 = vadd.f32 %v703, -1.4531521
  %v706 = vadd.f32 %v704, -1.4531521
  %v707 = vmul.f32 %v705, %v700
  %v708 = vmul.f32 %v706, %v702
  %v709 = vadd.f32 %v707, 1.4214138
  %v710 = vadd.f32 %v708, 1.4214138
  %v711 = vmul.f32 %v709, %v700
  %v712 = vmul.f32 %v710, %v702
  %v713 = vadd.f32 %v711, -0.28449672
  %v714 = vadd.f32 %v712, -0.28449672
  %v715 = vmul.f32 %v713, %v700
  %v716 = vmul.f32 %v714, %v702
  %v717 = vadd.f32 %v715, 0.2548296
  %v718 = vadd.f32 %v716, 0.2548296
  %v719 = vmul.f32 %v717, %v700
  %v720 = vmul.f32 %v718, %v702
  %v721 = vsub.f32 0.0, %v693
  %v722 = vsub.f32 0.0, %v694
  %v723 = vmul.f32 %v721, %v693
  %v724 = vmul.f32 %v722, %v694
  %v725 = vmul.f32 %v723, 1.442695
  %v726 = vpow.pop %v725
  %v727 = vmul.f32 %v724, 1.442695
  %v728 = vpow.pop %v727
  %v729 = vmul.f32 %v719, %v726
  %v730 = vmul.f32 %v720, %v728
  %v731 = vsub.f32 1.0, %v729
  %v732 = vsub.f32 1.0, %v730
  %v733 = vmul.f32 %v691, %v731
  %v734 = vmul.f32 %v692, %v732
  %v735 = vadd.f32 %v733, 1.0
  %v736 = vadd.f32 %v734, 1.0
  %v737 = vmul.f32 %v685, %v735
  %v738 = vmul.f32 %v686, %v736
  %v739 = vld [vmem:[%s14] sm:$0xff]
  %v740 = vld [vmem:[%s14 + $0x8] sm:$0xff]
  %v741 = vld [vmem:[%s15] sm:$0x1]
  %v743 = vlaneseq
  %v744 = vshrl.u32 %v743, 7
  %v745 = vsub.s32 0, %v744
  %v746 = vrot.slane %v741, %v745
  %v749 = vsel %vm219, %v737, 0
  %v752 = vsel %vm219, %v738, 0
  %754 = vmatprep.subr.mxu0 0.0
  %755 = vmatpush1.msra.mxu0 0.0
  %756 = vmatprep.subr.mxu0 0.0
  %757 = vmatpush1.msra.mxu0 0.0
  %758 = vmatprep.subr.mxu0 0.0
  %759 = vmatpush1.msra.mxu0 0.0
  %760 = vmatprep.subr.mxu0 0.0
  %761 = vmatpush1.msra.mxu0 0.0
  %762 = vmatprep.subr.mxu0 0.0
  %763 = vmatpush1.msra.mxu0 0.0
  %764 = vmatprep.subr.mxu0 0.0
  %765 = vmatpush1.msra.mxu0 0.0
  %766 = vmatprep.subr.mxu0 0.0
  %767 = vmatpush1.msra.mxu0 0.0
  %768 = vmatprep.subr.mxu0 0.0
  %769 = vmatpush1.msra.mxu0 0.0
  %770 = vmatprep.subr.mxu0 0.0
  %771 = vmatpush1.msra.mxu0 0.0
  %772 = vmatprep.subr.mxu0 0.0
  %773 = vmatpush1.msra.mxu0 0.0
  %774 = vmatprep.subr.mxu0 0.0
  %775 = vmatpush1.msra.mxu0 0.0
  %776 = vmatprep.subr.mxu0 0.0
  %777 = vmatpush1.msra.mxu0 0.0
  %778 = vmatprep.subr.mxu0 0.0
  %779 = vmatpush1.msra.mxu0 0.0
  %780 = vmatprep.subr.mxu0 0.0
  %781 = vmatpush1.msra.mxu0 0.0
  %782 = vmatprep.subr.mxu0 0.0
  %783 = vmatpush1.msra.mxu0 %v740
  %784 = vmatprep.subr.mxu0 0.0
  %785 = vmatpush1.msra.mxu0 %v739
  %786 = vmatprep.subr.mxu0 0.0
  %787 = vmatpush2.msra.mxu0 0.0
  %788 = vmatprep.subr.mxu0 0.0
  %789 = vmatpush2.msra.mxu0 0.0
  %790 = vmatprep.subr.mxu0 0.0
  %791 = vmatpush2.msra.mxu0 0.0
  %792 = vmatprep.subr.mxu0 0.0
  %793 = vmatpush2.msra.mxu0 0.0
  %794 = vmatprep.subr.mxu0 0.0
  %795 = vmatpush2.msra.mxu0 0.0
  %796 = vmatprep.subr.mxu0 0.0
  %797 = vmatpush2.msra.mxu0 0.0
  %798 = vmatprep.subr.mxu0 0.0
  %799 = vmatpush2.msra.mxu0 0.0
  %800 = vmatprep.subr.mxu0 0.0
  %801 = vmatpush2.msra.mxu0 0.0
  %802 = vmatprep.subr.mxu0 0.0
  %803 = vmatpush2.msra.mxu0 0.0
  %804 = vmatprep.subr.mxu0 0.0
  %805 = vmatpush2.msra.mxu0 0.0
  %806 = vmatprep.subr.mxu0 0.0
  %807 = vmatpush2.msra.mxu0 0.0
  %808 = vmatprep.subr.mxu0 0.0
  %809 = vmatpush2.msra.mxu0 0.0
  %810 = vmatprep.subr.mxu0 0.0
  %811 = vmatpush2.msra.mxu0 0.0
  %812 = vmatprep.subr.mxu0 0.0
  %813 = vmatpush2.msra.mxu0 0.0
  %814 = vmatprep.subr.mxu0 0.0
  %815 = vmatpush2.msra.mxu0 0.0
  %816 = vmatprep.subr.mxu0 0.0
  %817 = vmatpush2.msra.mxu0 0.0
  %818 = vmatprep.mubr.f32.mxu0 0.0
  %819 = vmatmul.mubr.f32.gmra.mxu0 %v749
  %v820 = vpop.f32.mrf.mxu0
  %v821 = vadd.f32 %v746, %v820
  %v822 = vpop.f32.mrf.mxu0
  %823 = vmatprep.mubr.f32.mxu0 0.0
  %824 = vmatmul.mubr.f32.gmra.mxu0 %v752
  %v825 = vpop.f32.mrf.mxu0
  %v826 = vadd.f32 %v746, %v825
  %v827 = vpop.f32.mrf.mxu0
  %828 = vdwg.mxu0
  %v829 = vadd.f32 %v348, %v585
  %v830 = vadd.f32 %v349, %v590
  %v831 = vadd.f32 %v829, %v821
  %v832 = vadd.f32 %v830, %v826
  %v833 = vld [vmem:[%s16] sm:$0x1]
  %v834 = vld [vmem:[%s17] sm:$0x1]
  %v835 = vsel %vm74, %v831, 0.0
  %836 = vadd.xlane.f32.xlu0 %v835
  %v837 = vpop.xlane.xlu0 %836
  %v838 = vsel %vm74, %v832, 0.0
  %839 = vadd.xlane.f32.xlu0 %v838
  %v840 = vpop.xlane.xlu0 %839
  %v841 = vmul.f32 %v837, %v313
  %v842 = vmul.f32 %v840, %v313
  %v843 = vsub.f32 %v831, %v841
  %v844 = vsub.f32 %v832, %v842
  %v845 = vmul.f32 %v843, %v843
  %v846 = vmul.f32 %v844, %v844
  %v847 = vsel %vm74, %v845, 0.0
  %848 = vadd.xlane.f32.xlu0 %v847
  %v849 = vpop.xlane.xlu0 %848
  %v850 = vsel %vm74, %v846, 0.0
  %851 = vadd.xlane.f32.xlu0 %v850
  %v852 = vpop.xlane.xlu0 %851
  %v853 = vmul.f32 %v849, %v313
  %v854 = vmul.f32 %v852, %v313
  %v855 = vadd.f32 %v853, 1e-05
  %v856 = vadd.f32 %v854, 1e-05
  %v857 = vrsqrt.pop %v855
  %v858 = vrsqrt.pop %v856
  %v859 = vmul.f32 %v843, %v857
  %v860 = vmul.f32 %v844, %v858
  %v862 = vlaneseq
  %v863 = vshrl.u32 %v862, 7
  %v864 = vsub.s32 0, %v863
  %v865 = vrot.slane %v833, %v864
  %v867 = vmul.f32 %v859, %v865
  %v868 = vmul.f32 %v860, %v865
  %v870 = vlaneseq
  %v871 = vshrl.u32 %v870, 7
  %v872 = vsub.s32 0, %v871
  %v873 = vrot.slane %v834, %v872
  %v875 = vadd.f32 %v867, %v873
  %v876 = vadd.f32 %v868, %v873
  %877 = vst.msk [vmem:[%s18] sm:$0xff] %vm74, %v875
  %878 = vst.msk [vmem:[%s18 + $0x8] sm:$0xff] %vm74, %v876
  // Predicated region
  $region74: #{transformer_encoder_layer.3} parent=0 // pred_check
    _
  $region75: #{transformer_encoder_layer.3} parent=0 // pred_check_branch
    %880 = sbr.rel (0) target = $region77
  $region76: #{transformer_encoder_layer.3} parent=0 // pred_region
    _
  $region77: #{transformer_encoder_layer.3} parent=0 // pred_fallthru
    _
  // Predicated region
  $region78: #{transformer_encoder_layer.3} parent=0 // pred_check
    _
  $region79: #{transformer_encoder_layer.3} parent=0 // pred_check_branch
    %882 = sbr.rel (0) target = $region81
  $region80: #{transformer_encoder_layer.3} parent=0 // pred_region
    _
  $region81: #{transformer_encoder_layer.3} parent=0 // pred_fallthru
    _

// kernel: transformer_encoder_layer.2
$region0: #{transformer_encoder_layer.2}
  #allocation0 [shape = 'u32[]', space=smem, size = 0x4, offset = 0x4, fixed_abs, tag = 'smem constant byte address 0x4 - core index']
  #allocation1 [shape = 'u32[144,128]{1,0:T(1,128)}', space=vmem, size = 0x12000, scoped, tag = 'internal scratch']
  %s0 = inlined_call_operand.vmem [shape: f32[2,8,32], index: 0, kind: input, shape index: {}]
  %s1 = inlined_call_operand.vmem [shape: f32[32,96], index: 1, kind: input, shape index: {}]
  %s2 = inlined_call_operand.vmem [shape: f32[1,96], index: 2, kind: input, shape index: {}]
  %s3 = inlined_call_operand.vmem [shape: f32[32,32], index: 3, kind: input, shape index: {}]
  %s4 = inlined_call_operand.vmem [shape: f32[1,32], index: 4, kind: input, shape index: {}]
  %s5 = inlined_call_operand.vmem [shape: f32[2,8,32], index: 5, kind: output, shape index: {}]
  %s6 = sld [smem:[#allocation0]]
  $region53: #{transformer_encoder_layer.2} parent=0
    _
  %s8 = ssub.s32 1, %s6
  %s9 = scalar_select 0, %s8, %s6
  loop: start=0, step=1, limit=4
  $region2: #{transformer_encoder_layer.2} parent=0 // loop_pre_header
    _
  $region3: #{transformer_encoder_layer.2} parent=0 // loop_header
    %s11 = sphi 0, %s15
    %p12 = scmp.ge.s32.totalorder %s11, 4
    %s21 = sphi 0, %s23
    %s24 = sphi 0, %s21
    %s25 = sphi 0, %s24
    %s41 = sphi 0, %s25
    %s45 = sphi 0, %s45
    %s47 = sphi 0, %s45
    %s48 = sphi 0, %s47
    %s62 = sphi 0, %s48
    %s66 = sphi 0, %s66
    %s68 = sphi 0, %s66
    %s69 = sphi 0, %s68
    %s83 = sphi 0, %s69
    %s87 = sphi 0, %s87
    %s89 = sphi 0, %s87
    %s90 = sphi 0, %s89
    %s104 = sphi 0, %s90
    %s108 = sphi 0, %s108
    %s110 = sphi 0, %s108
    %s111 = sphi 0, %s110
    %s125 = sphi 0, %s111
    %s131 = sphi 0, %s133
    %s134 = sphi 0, %s131
    %s135 = sphi 0, %s134
    %s151 = sphi 0, %s135
  $region4: #{transformer_encoder_layer.2} parent=0 // loop_header_branch
    %14 = sbr.rel (%p12) target = $region8
  $region5: #{transformer_encoder_layer.2} parent=0 // loop_body
    %s16 = ssub.s32 %s11, 1
    %s17 = ssub.s32 %s11, 2
    %s18 = sadd.s32 %s11, 1
    %s19 = ssub.s32 %s11, %s18
    %p20 = scmp.eq.s32.totalorder %s19, 0
    %s22 = sadd.s32 %s21, 1
    %s23 = scalar_select %p20, %s21, %s22
    %p26 = pneg %p20
    %p27 = scmp.eq.s32.totalorder %s11, 1
    %p28 = por %p26, %p27
    %p29 = scmp.ne.s32.totalorder %s21, %s24
    %p30 = scmp.eq.s32.totalorder %s11, 0
    %p31 = por %p29, %p30
    %p32 = scmp.ne.s32.totalorder %s21, %s24
    %p33 = scmp.eq.s32.totalorder %s16, 1
    %p34 = por %p32, %p33
    %p35 = scmp.ne.s32.totalorder %s24, %s25
    %p36 = scmp.eq.s32.totalorder %s16, 0
    %p37 = por %p35, %p36
    %p38 = scmp.ne.s32.totalorder %s24, %s25
    %p39 = scmp.eq.s32.totalorder %s17, 1
    %p40 = por %p38, %p39
    %p42 = scmp.ne.s32.totalorder %s25, %s41
    %p43 = scmp.eq.s32.totalorder %s17, 0
    %p44 = por %p42, %p43
    %s46 = sadd.s32 %s45, 1
    %p49 = scmp.eq.s32.totalorder %s11, 1
    %p50 = scmp.ne.s32.totalorder %s45, %s47
    %p51 = scmp.eq.s32.totalorder %s11, 0
    %p52 = por %p50, %p51
    %p53 = scmp.ne.s32.totalorder %s45, %s47
    %p54 = scmp.eq.s32.totalorder %s16, 1
    %p55 = por %p53, %p54
    %p56 = scmp.ne.s32.totalorder %s47, %s48
    %p57 = scmp.eq.s32.totalorder %s16, 0
    %p58 = por %p56, %p57
    %p59 = scmp.ne.s32.totalorder %s47, %s48
    %p60 = scmp.eq.s32.totalorder %s17, 1
    %p61 = por %p59, %p60
    %p63 = scmp.ne.s32.totalorder %s48, %s62
    %p64 = scmp.eq.s32.totalorder %s17, 0
    %p65 = por %p63, %p64
    %s67 = sadd.s32 %s66, 1
    %p70 = scmp.eq.s32.totalorder %s11, 1
    %p71 = scmp.ne.s32.totalorder %s66, %s68
    %p72 = scmp.eq.s32.totalorder %s11, 0
    %p73 = por %p71, %p72
    %p74 = scmp.ne.s32.totalorder %s66, %s68
    %p75 = scmp.eq.s32.totalorder %s16, 1
    %p76 = por %p74, %p75
    %p77 = scmp.ne.s32.totalorder %s68, %s69
    %p78 = scmp.eq.s32.totalorder %s16, 0
    %p79 = por %p77, %p78
    %p80 = scmp.ne.s32.totalorder %s68, %s69
    %p81 = scmp.eq.s32.totalorder %s17, 1
    %p82 = por %p80, %p81
    %p84 = scmp.ne.s32.totalorder %s69, %s83
    %p85 = scmp.eq.s32.totalorder %s17, 0
    %p86 = por %p84, %p85
    %s88 = sadd.s32 %s87, 1
    %p91 = scmp.eq.s32.totalorder %s11, 1
    %p92 = scmp.ne.s32.totalorder %s87, %s89
    %p93 = scmp.eq.s32.totalorder %s11, 0
    %p94 = por %p92, %p93
    %p95 = scmp.ne.s32.totalorder %s87, %s89
    %p96 = scmp.eq.s32.totalorder %s16, 1
    %p97 = por %p95, %p96
    %p98 = scmp.ne.s32.totalorder %s89, %s90
    %p99 = scmp.eq.s32.totalorder %s16, 0
    %p100 = por %p98, %p99
    %p101 = scmp.ne.s32.totalorder %s89, %s90
    %p102 = scmp.eq.s32.totalorder %s17, 1
    %p103 = por %p101, %p102
    %p105 = scmp.ne.s32.totalorder %s90, %s104
    %p106 = scmp.eq.s32.totalorder %s17, 0
    %p107 = por %p105, %p106
    %s109 = sadd.s32 %s108, 1
    %p112 = scmp.eq.s32.totalorder %s11, 1
    %p113 = scmp.ne.s32.totalorder %s108, %s110
    %p114 = scmp.eq.s32.totalorder %s11, 0
    %p115 = por %p113, %p114
    %p116 = scmp.ne.s32.totalorder %s108, %s110
    %p117 = scmp.eq.s32.totalorder %s16, 1
    %p118 = por %p116, %p117
    %p119 = scmp.ne.s32.totalorder %s110, %s111
    %p120 = scmp.eq.s32.totalorder %s16, 0
    %p121 = por %p119, %p120
    %p122 = scmp.ne.s32.totalorder %s110, %s111
    %p123 = scmp.eq.s32.totalorder %s17, 1
    %p124 = por %p122, %p123
    %p126 = scmp.ne.s32.totalorder %s111, %s125
    %p127 = scmp.eq.s32.totalorder %s17, 0
    %p128 = por %p126, %p127
    %s129 = ssub.s32 %s11, %s18
    %p130 = scmp.eq.s32.totalorder %s129, 0
    %s132 = sadd.s32 %s131, 1
    %s133 = scalar_select %p130, %s131, %s132
    %p136 = pneg %p130
    %p137 = scmp.eq.s32.totalorder %s11, 1
    %p138 = por %p136, %p137
    %p139 = scmp.ne.s32.totalorder %s131, %s134
    %p140 = scmp.eq.s32.totalorder %s11, 0
    %p141 = por %p139, %p140
    %p142 = scmp.ne.s32.totalorder %s131, %s134
    %p143 = scmp.eq.s32.totalorder %s16, 1
    %p144 = por %p142, %p143
    %p145 = scmp.ne.s32.totalorder %s134, %s135
    %p146 = scmp.eq.s32.totalorder %s16, 0
    %p147 = por %p145, %p146
    %p148 = scmp.ne.s32.totalorder %s134, %s135
    %p149 = scmp.eq.s32.totalorder %s17, 1
    %p150 = por %p148, %p149
    %p152 = scmp.ne.s32.totalorder %s135, %s151
    %p153 = scmp.eq.s32.totalorder %s17, 0
    %p154 = por %p152, %p153
    %p155 = scmp.le.s32.totalorder 1, %s11
    %p156 = scmp.lt.s32.totalorder %s11, 3
    %p157 = pnand %p155, %p156
    %p158 = pneg %p157
    // Predicated region
    $region9: #{transformer_encoder_layer.2} parent=5 // pred_check
      _
    $region10: #{transformer_encoder_layer.2} parent=5 // pred_check_branch
      %160 = sbr.rel (%p157) target = $region12
    $region11: #{transformer_encoder_layer.2} parent=5 // pred_region
      %s161 = ssub.s32 %s11, 1
      // Predicated region
      $region13: #{transformer_encoder_layer.2} parent=11 // pred_check
        %p162 = pneg %p58
      $region14: #{transformer_encoder_layer.2} parent=11 // pred_check_branch
        %164 = sbr.rel (%p162) target = $region16
      $region15: #{transformer_encoder_layer.2} parent=11 // pred_region
        _
      $region16: #{transformer_encoder_layer.2} parent=11 // pred_fallthru
        _
      // Predicated region
      $region17: #{transformer_encoder_layer.2} parent=11 // pred_check
        %p165 = pneg %p79
      $region18: #{transformer_encoder_layer.2} parent=11 // pred_check_branch
        %167 = sbr.rel (%p165) target = $region20
      $region19: #{transformer_encoder_layer.2} parent=11 // pred_region
        _
      $region20: #{transformer_encoder_layer.2} parent=11 // pred_fallthru
        _
      // Predicated region
      $region21: #{transformer_encoder_layer.2} parent=11 // pred_check
        %p168 = pneg %p100
      $region22: #{transformer_encoder_layer.2} parent=11 // pred_check_branch
        %170 = sbr.rel (%p168) target = $region24
      $region23: #{transformer_encoder_layer.2} parent=11 // pred_region
        _
      $region24: #{transformer_encoder_layer.2} parent=11 // pred_fallthru
        _
      // Predicated region
      $region25: #{transformer_encoder_layer.2} parent=11 // pred_check
        %p171 = pneg %p121
      $region26: #{transformer_encoder_layer.2} parent=11 // pred_check_branch
        %173 = sbr.rel (%p171) target = $region28
      $region27: #{transformer_encoder_layer.2} parent=11 // pred_region
        _
      $region28: #{transformer_encoder_layer.2} parent=11 // pred_fallthru
        _
    $region12: #{transformer_encoder_layer.2} parent=5 // pred_fallthru
      _
    %p174 = scmp.lt.s32.totalorder %s11, 2
    // Predicated region
    $region29: #{transformer_encoder_layer.2} parent=5 // pred_check
      %p175 = pneg %p174
    $region30: #{transformer_encoder_layer.2} parent=5 // pred_check_branch
      %177 = sbr.rel (%p175) target = $region32
    $region31: #{transformer_encoder_layer.2} parent=5 // pred_region
      // Predicated region
      $region33: #{transformer_encoder_layer.2} parent=31 // pred_check
        %p178 = pneg %p31
      $region34: #{transformer_encoder_layer.2} parent=31 // pred_check_branch
        %180 = sbr.rel (%p178) target = $region36
      $region35: #{transformer_encoder_layer.2} parent=31 // pred_region
        %p181 = scmp.lt.s32.totalorder %s11, 1
        %s182 = scalar_select %p181, %s11, 1
        %s183 = smul.addr %s182, 8
        %s184 = scalar_lea.vmem %s0, %s183
      $region36: #{transformer_encoder_layer.2} parent=31 // pred_fallthru
        _
    $region32: #{transformer_encoder_layer.2} parent=5 // pred_fallthru
      _
    %p185 = scmp.le.s32.totalorder 1, %s11
    %p186 = scmp.lt.s32.totalorder %s11, 3
    %p187 = pnand %p185, %p186
    %p188 = pneg %p187
    // Predicated region
    $region37: #{transformer_encoder_layer.2} parent=5 // pred_check
      _
    $region38: #{transformer_encoder_layer.2} parent=5 // pred_check_branch
      %190 = sbr.rel (%p187) target = $region40
    $region39: #{transformer_encoder_layer.2} parent=5 // pred_region
      %s191 = ssub.s32 %s11, 1
      %p192 = scmp.lt.s32.totalorder %s16, 1
      %s193 = scalar_select %p192, %s16, 1
      %s194 = smul.addr %s193, 8
      %s195 = scalar_lea.vmem %s0, %s194
      %p196 = pneg %p37
      %p197 = pneg %p34
      %p198 = pneg %p58
      %p199 = pneg %p55
      %p200 = pneg %p79
      %p201 = pneg %p76
      %p202 = pneg %p100
      %p203 = pneg %p97
      %p204 = pneg %p121
      %p205 = pneg %p118
      %p206 = pneg %p147
      %p207 = pneg %p144
      %p208 = scmp.lt.s32.totalorder %s16, 1
      %s209 = scalar_select %p208, %s16, 1
      %s210 = smul.addr %s209, 8
      %s211 = scalar_lea.vmem %s5, %s210
      %p212 = scmp.lt.s32.totalorder %s16, 1
      %s213 = scalar_select %p212, %s16, 1
      %s214 = smul.addr %s213, 8
      %s215 = scalar_lea.vmem %s0, %s214
      %p216 = scmp.lt.s32.totalorder %s16, 1
      %s217 = scalar_select %p216, %s16, 1
      %s218 = smul.addr %s217, 8
      %s219 = scalar_lea.vmem %s5, %s218
      %v220 = vld [vmem:[%s215] sm:$0xff]
      %v221 = vld [vmem:[%s1] sm:$0xff]
      %v222 = vld [vmem:[%s1 + $0x8] sm:$0xff]
      %v223 = vld [vmem:[%s1 + $0x10] sm:$0xff]
      %v224 = vld [vmem:[%s1 + $0x18] sm:$0xff]
      %v225 = vld [vmem:[%s2] sm:$0x1]
      %v227 = vlaneseq
      %v228 = vshrl.u32 %v227, 7
      %v229 = vsub.s32 0, %v228
      %v230 = vrot.slane %v225, %v229
      %vm232 = vcmask 261120
      %v234 = vsel %vm232, %v220, 0
      %236 = vmatprep.subr.mxu0 0.0
      %237 = vmatpush1.msra.mxu0 0.0
      %238 = vmatprep.subr.mxu0 0.0
      %239 = vmatpush1.msra.mxu0 0.0
      %240 = vmatprep.subr.mxu0 0.0
      %241 = vmatpush1.msra.mxu0 0.0
      %242 = vmatprep.subr.mxu0 0.0
      %243 = vmatpush1.msra.mxu0 0.0
      %244 = vmatprep.subr.mxu0 0.0
      %245 = vmatpush1.msra.mxu0 0.0
      %246 = vmatprep.subr.mxu0 0.0
      %247 = vmatpush1.msra.mxu0 0.0
      %248 = vmatprep.subr.mxu0 0.0
      %249 = vmatpush1.msra.mxu0 0.0
      %250 = vmatprep.subr.mxu0 0.0
      %251 = vmatpush1.msra.mxu0 0.0
      %252 = vmatprep.subr.mxu0 0.0
      %253 = vmatpush1.msra.mxu0 0.0
      %254 = vmatprep.subr.mxu0 0.0
      %255 = vmatpush1.msra.mxu0 0.0
      %256 = vmatprep.subr.mxu0 0.0
      %257 = vmatpush1.msra.mxu0 0.0
      %258 = vmatprep.subr.mxu0 0.0
      %259 = vmatpush1.msra.mxu0 0.0
      %260 = vmatprep.subr.mxu0 0.0
      %261 = vmatpush1.msra.mxu0 %v224
      %262 = vmatprep.subr.mxu0 0.0
      %263 = vmatpush1.msra.mxu0 %v223
      %264 = vmatprep.subr.mxu0 0.0
      %265 = vmatpush1.msra.mxu0 %v222
      %266 = vmatprep.subr.mxu0 0.0
      %267 = vmatpush1.msra.mxu0 %v221
      %268 = vmatprep.subr.mxu0 0.0
      %269 = vmatpush2.msra.mxu0 0.0
      %270 = vmatprep.subr.mxu0 0.0
      %271 = vmatpush2.msra.mxu0 0.0
      %272 = vmatprep.subr.mxu0 0.0
      %273 = vmatpush2.msra.mxu0 0.0
      %274 = vmatprep.subr.mxu0 0.0
      %275 = vmatpush2.msra.mxu0 0.0
      %276 = vmatprep.subr.mxu0 0.0
      %277 = vmatpush2.msra.mxu0 0.0
      %278 = vmatprep.subr.mxu0 0.0
      %279 = vmatpush2.msra.mxu0 0.0
      %280 = vmatprep.subr.mxu0 0.0
      %281 = vmatpush2.msra.mxu0 0.0
      %282 = vmatprep.subr.mxu0 0.0
      %283 = vmatpush2.msra.mxu0 0.0
      %284 = vmatprep.subr.mxu0 0.0
      %285 = vmatpush2.msra.mxu0 0.0
      %286 = vmatprep.subr.mxu0 0.0
      %287 = vmatpush2.msra.mxu0 0.0
      %288 = vmatprep.subr.mxu0 0.0
      %289 = vmatpush2.msra.mxu0 0.0
      %290 = vmatprep.subr.mxu0 0.0
      %291 = vmatpush2.msra.mxu0 0.0
      %292 = vmatprep.subr.mxu0 0.0
      %293 = vmatpush2.msra.mxu0 0.0
      %294 = vmatprep.subr.mxu0 0.0
      %295 = vmatpush2.msra.mxu0 0.0
      %296 = vmatprep.subr.mxu0 0.0
      %297 = vmatpush2.msra.mxu0 0.0
      %298 = vmatprep.subr.mxu0 0.0
      %299 = vmatpush2.msra.mxu0 0.0
      %300 = vmatprep.mubr.f32.mxu0 0.0
      %301 = vmatmul.mubr.f32.gmra.mxu0 %v234
      %v302 = vpop.f32.mrf.mxu0
      %v303 = vadd.f32 %v230, %v302
      %v304 = vpop.f32.mrf.mxu0
      %305 = vdwg.mxu0
      %v306 = vmul.f32 %v303, 0.35355338
      %308 = vrot.lane.b32.xlu0 %v303, 96
      %v309 = vpop.permute.xlu0 %308
      %vm310 = vcmask 64512
      %v312 = vsel %vm310, %v306, 0
      %v314 = vsel %vm310, %v309, 0
      %316 = vmatprep.subr.mxu0 0.0
      %317 = vmatpush1.xpose.msra.mxu0 0.0
      %318 = vmatprep.subr.mxu0 0.0
      %319 = vmatpush1.xpose.msra.mxu0 0.0
      %320 = vmatprep.subr.mxu0 0.0
      %321 = vmatpush1.xpose.msra.mxu0 0.0
      %322 = vmatprep.subr.mxu0 0.0
      %323 = vmatpush1.xpose.msra.mxu0 0.0
      %324 = vmatprep.subr.mxu0 0.0
      %325 = vmatpush1.xpose.msra.mxu0 0.0
      %326 = vmatprep.subr.mxu0 0.0
      %327 = vmatpush1.xpose.msra.mxu0 0.0
      %328 = vmatprep.subr.mxu0 0.0
      %329 = vmatpush1.xpose.msra.mxu0 0.0
      %330 = vmatprep.subr.mxu0 0.0
      %331 = vmatpush1.xpose.msra.mxu0 0.0
      %332 = vmatprep.subr.mxu0 0.0
      %333 = vmatpush1.xpose.msra.mxu0 0.0
      %334 = vmatprep.subr.mxu0 0.0
      %335 = vmatpush1.xpose.msra.mxu0 0.0
      %336 = vmatprep.subr.mxu0 0.0
      %337 = vmatpush1.xpose.msra.mxu0 0.0
      %338 = vmatprep.subr.mxu0 0.0
      %339 = vmatpush1.xpose.msra.mxu0 0.0
      %340 = vmatprep.subr.mxu0 0.0
      %341 = vmatpush1.xpose.msra.mxu0 0.0
      %342 = vmatprep.subr.mxu0 0.0
      %343 = vmatpush1.xpose.msra.mxu0 0.0
      %344 = vmatprep.subr.mxu0 0.0
      %345 = vmatpush1.xpose.msra.mxu0 0.0
      %346 = vmatprep.subr.mxu0 0.0
      %347 = vmatpush1.xpose.msra.mxu0 %v314
      %348 = vmatprep.subr.mxu0 0.0
      %349 = vmatpush2.xpose.msra.mxu0 0.0
      %350 = vmatprep.subr.mxu0 0.0
      %351 = vmatpush2.xpose.msra.mxu0 0.0
      %352 = vmatprep.subr.mxu0 0.0
      %353 = vmatpush2.xpose.msra.mxu0 0.0
      %354 = vmatprep.subr.mxu0 0.0
      %355 = vmatpush2.xpose.msra.mxu0 0.0
      %356 = vmatprep.subr.mxu0 0.0
      %357 = vmatpush2.xpose.msra.mxu0 0.0
      %358 = vmatprep.subr.mxu0 0.0
      %359 = vmatpush2.xpose.msra.mxu0 0.0
      %360 = vmatprep.subr.mxu0 0.0
      %361 = vmatpush2.xpose.msra.mxu0 0.0
      %362 = vmatprep.subr.mxu0 0.0
      %363 = vmatpush2.xpose.msra.mxu0 0.0
      %364 = vmatprep.subr.mxu0 0.0
      %365 = vmatpush2.xpose.msra.mxu0 0.0
      %366 = vmatprep.subr.mxu0 0.0
      %367 = vmatpush2.xpose.msra.mxu0 0.0
      %368 = vmatprep.subr.mxu0 0.0
      %369 = vmatpush2.xpose.msra.mxu0 0.0
      %370 = vmatprep.subr.mxu0 0.0
      %371 = vmatpush2.xpose.msra.mxu0 0.0
      %372 = vmatprep.subr.mxu0 0.0
      %373 = vmatpush2.xpose.msra.mxu0 0.0
      %374 = vmatprep.subr.mxu0 0.0
      %375 = vmatpush2.xpose.msra.mxu0 0.0
      %376 = vmatprep.subr.mxu0 0.0
      %377 = vmatpush2.xpose.msra.mxu0 0.0
      %378 = vmatprep.subr.mxu0 0.0
      %379 = vmatpush2.xpose.msra.mxu0 0.0
      %380 = vmatprep.mubr.f32.mxu0 0.0
      %381 = vmatmul.mubr.f32.gmra.mxu0 %v312
      %v382 = vpop.f32.mrf.mxu0
      %v383 = vadd.f32 0.0, %v382
      %v384 = vpop.f32.mrf.mxu0
      %385 = vdwg.mxu0
      %v386 = vsel %vm310, %v383, -inf
      %387 = vmax.xlane.f32.xlu0 %v386
      %v388 = vpop.xlane.xlu0 %387
      %v389 = vsub.f32 %v383, %v388
      %v390 = vmul.f32 %v389, 1.442695
      %v391 = vpow.pop %v390
      %v392 = vsel %vm310, %v391, 0.0
      %393 = vadd.xlane.f32.xlu0 %v392
      %v394 = vpop.xlane.xlu0 %393
      %v395 = vrcp.pop %v394
      %v396 = vmul.f32 %v391, %v395
      %397 = vrot.lane.b32.xlu0 %v303, 64
      %v398 = vpop.permute.xlu0 %397
      %v401 = vsel %vm310, %v396, 0
      %403 = vmatprep.subr.mxu0 0.0
      %404 = vmatpush1.msra.mxu0 0.0
      %405 = vmatprep.subr.mxu0 0.0
      %406 = vmatpush1.msra.mxu0 0.0
      %407 = vmatprep.subr.mxu0 0.0
      %408 = vmatpush1.msra.mxu0 0.0
      %409 = vmatprep.subr.mxu0 0.0
      %410 = vmatpush1.msra.mxu0 0.0
      %411 = vmatprep.subr.mxu0 0.0
      %412 = vmatpush1.msra.mxu0 0.0
      %413 = vmatprep.subr.mxu0 0.0
      %414 = vmatpush1.msra.mxu0 0.0
      %415 = vmatprep.subr.mxu0 0.0
      %416 = vmatpush1.msra.mxu0 0.0
      %417 = vmatprep.subr.mxu0 0.0
      %418 = vmatpush1.msra.mxu0 0.0
      %419 = vmatprep.subr.mxu0 0.0
      %420 = vmatpush1.msra.mxu0 0.0
      %421 = vmatprep.subr.mxu0 0.0
      %422 = vmatpush1.msra.mxu0 0.0
      %423 = vmatprep.subr.mxu0 0.0
      %424 = vmatpush1.msra.mxu0 0.0
      %425 = vmatprep.subr.mxu0 0.0
      %426 = vmatpush1.msra.mxu0 0.0
      %427 = vmatprep.subr.mxu0 0.0
      %428 = vmatpush1.msra.mxu0 0.0
      %429 = vmatprep.subr.mxu0 0.0
      %430 = vmatpush1.msra.mxu0 0.0
      %431 = vmatprep.subr.mxu0 0.0
      %432 = vmatpush1.msra.mxu0 0.0
      %433 = vmatprep.subr.mxu0 0.0
      %434 = vmatpush1.msra.mxu0 %v398
      %435 = vmatprep.subr.mxu0 0.0
      %436 = vmatpush2.msra.mxu0 0.0
      %437 = vmatprep.subr.mxu0 0.0
      %438 = vmatpush2.msra.mxu0 0.0
      %439 = vmatprep.subr.mxu0 0.0
      %440 = vmatpush2.msra.mxu0 0.0
      %441 = vmatprep.subr.mxu0 0.0
      %442 = vmatpush2.msra.mxu0 0.0
      %443 = vmatprep.subr.mxu0 0.0
      %444 = vmatpush2.msra.mxu0 0.0
      %445 = vmatprep.subr.mxu0 0.0
      %446 = vmatpush2.msra.mxu0 0.0
      %447 = vmatprep.subr.mxu0 0.0
      %448 = vmatpush2.msra.mxu0 0.0
      %449 = vmatprep.subr.mxu0 0.0
      %450 = vmatpush2.msra.mxu0 0.0
      %451 = vmatprep.subr.mxu0 0.0
      %452 = vmatpush2.msra.mxu0 0.0
      %453 = vmatprep.subr.mxu0 0.0
      %454 = vmatpush2.msra.mxu0 0.0
      %455 = vmatprep.subr.mxu0 0.0
      %456 = vmatpush2.msra.mxu0 0.0
      %457 = vmatprep.subr.mxu0 0.0
      %458 = vmatpush2.msra.mxu0 0.0
      %459 = vmatprep.subr.mxu0 0.0
      %460 = vmatpush2.msra.mxu0 0.0
      %461 = vmatprep.subr.mxu0 0.0
      %462 = vmatpush2.msra.mxu0 0.0
      %463 = vmatprep.subr.mxu0 0.0
      %464 = vmatpush2.msra.mxu0 0.0
      %465 = vmatprep.subr.mxu0 0.0
      %466 = vmatpush2.msra.mxu0 0.0
      %467 = vmatprep.mubr.f32.mxu0 0.0
      %468 = vmatmul.mubr.f32.gmra.mxu0 %v401
      %v469 = vpop.f32.mrf.mxu0
      %v470 = vadd.f32 0.0, %v469
      %v471 = vpop.f32.mrf.mxu0
      %472 = vdwg.mxu0
      %473 = vrot.lane.b32.xlu0 %v306, 120
      %v474 = vpop.permute.xlu0 %473
      %475 = vrot.lane.b32.xlu0 %v303, 88
      %v476 = vpop.permute.xlu0 %475
      %v477 = vsel %vm310, %v474, 0
      %v479 = vsel %vm310, %v476, 0
      %481 = vmatprep.subr.mxu0 0.0
      %482 = vmatpush1.xpose.msra.mxu0 0.0
      %483 = vmatprep.subr.mxu0 0.0
      %484 = vmatpush1.xpose.msra.mxu0 0.0
      %485 = vmatprep.subr.mxu0 0.0
      %486 = vmatpush1.xpose.msra.mxu0 0.0
      %487 = vmatprep.subr.mxu0 0.0
      %488 = vmatpush1.xpose.msra.mxu0 0.0
      %489 = vmatprep.subr.mxu0 0.0
      %490 = vmatpush1.xpose.msra.mxu0 0.0
      %491 = vmatprep.subr.mxu0 0.0
      %492 = vmatpush1.xpose.msra.mxu0 0.0
      %493 = vmatprep.subr.mxu0 0.0
      %494 = vmatpush1.xpose.msra.mxu0 0.0
      %495 = vmatprep.subr.mxu0 0.0
      %496 = vmatpush1.xpose.msra.mxu0 0.0
      %497 = vmatprep.subr.mxu0 0.0
      %498 = vmatpush1.xpose.msra.mxu0 0.0
      %499 = vmatprep.subr.mxu0 0.0
      %500 = vmatpush1.xpose.msra.mxu0 0.0
      %501 = vmatprep.subr.mxu0 0.0
      %502 = vmatpush1.xpose.msra.mxu0 0.0
      %503 = vmatprep.subr.mxu0 0.0
      %504 = vmatpush1.xpose.msra.mxu0 0.0
      %505 = vmatprep.subr.mxu0 0.0
      %506 = vmatpush1.xpose.msra.mxu0 0.0
      %507 = vmatprep.subr.mxu0 0.0
      %508 = vmatpush1.xpose.msra.mxu0 0.0
      %509 = vmatprep.subr.mxu0 0.0
      %510 = vmatpush1.xpose.msra.mxu0 0.0
      %511 = vmatprep.subr.mxu0 0.0
      %512 = vmatpush1.xpose.msra.mxu0 %v479
      %513 = vmatprep.subr.mxu0 0.0
      %514 = vmatpush2.xpose.msra.mxu0 0.0
      %515 = vmatprep.subr.mxu0 0.0
      %516 = vmatpush2.xpose.msra.mxu0 0.0
      %517 = vmatprep.subr.mxu0 0.0
      %518 = vmatpush2.xpose.msra.mxu0 0.0
      %519 = vmatprep.subr.mxu0 0.0
      %520 = vmatpush2.xpose.msra.mxu0 0.0
      %521 = vmatprep.subr.mxu0 0.0
      %522 = vmatpush2.xpose.msra.mxu0 0.0
      %523 = vmatprep.subr.mxu0 0.0
      %524 = vmatpush2.xpose.msra.mxu0 0.0
      %525 = vmatprep.subr.mxu0 0.0
      %526 = vmatpush2.xpose.msra.mxu0 0.0
      %527 = vmatprep.subr.mxu0 0.0
      %528 = vmatpush2.xpose.msra.mxu0 0.0
      %529 = vmatprep.subr.mxu0 0.0
      %530 = vmatpush2.xpose.msra.mxu0 0.0
      %531 = vmatprep.subr.mxu0 0.0
      %532 = vmatpush2.xpose.msra.mxu0 0.0
      %533 = vmatprep.subr.mxu0 0.0
      %534 = vmatpush2.xpose.msra.mxu0 0.0
      %535 = vmatprep.subr.mxu0 0.0
      %536 = vmatpush2.xpose.msra.mxu0 0.0
      %537 = vmatprep.subr.mxu0 0.0
      %538 = vmatpush2.xpose.msra.mxu0 0.0
      %539 = vmatprep.subr.mxu0 0.0
      %540 = vmatpush2.xpose.msra.mxu0 0.0
      %541 = vmatprep.subr.mxu0 0.0
      %542 = vmatpush2.xpose.msra.mxu0 0.0
      %543 = vmatprep.subr.mxu0 0.0
      %544 = vmatpush2.xpose.msra.mxu0 0.0
      %545 = vmatprep.mubr.f32.mxu0 0.0
      %546 = vmatmul.mubr.f32.gmra.mxu0 %v477
      %v547 = vpop.f32.mrf.mxu0
      %v548 = vadd.f32 0.0, %v547
      %v549 = vpop.f32.mrf.mxu0
      %550 = vdwg.mxu0
      %v551 = vsel %vm310, %v548, -inf
      %552 = vmax.xlane.f32.xlu0 %v551
      %v553 = vpop.xlane.xlu0 %552
      %v554 = vsub.f32 %v548, %v553
      %v555 = vmul.f32 %v554, 1.442695
      %v556 = vpow.pop %v555
      %v557 = vsel %vm310, %v556, 0.0
      %558 = vadd.xlane.f32.xlu0 %v557
      %v559 = vpop.xlane.xlu0 %558
      %v560 = vrcp.pop %v559
      %v561 = vmul.f32 %v556, %v560
      %562 = vrot.lane.b32.xlu0 %v303, 56
      %v563 = vpop.permute.xlu0 %562
      %v566 = vsel %vm310, %v561, 0
      %568 = vmatprep.subr.mxu0 0.0
      %569 = vmatpush1.msra.mxu0 0.0
      %570 = vmatprep.subr.mxu0 0.0
      %571 = vmatpush1.msra.mxu0 0.0
      %572 = vmatprep.subr.mxu0 0.0
      %573 = vmatpush1.msra.mxu0 0.0
      %574 = vmatprep.subr.mxu0 0.0
      %575 = vmatpush1.msra.mxu0 0.0
      %576 = vmatprep.subr.mxu0 0.0
      %577 = vmatpush1.msra.mxu0 0.0
      %578 = vmatprep.subr.mxu0 0.0
      %579 = vmatpush1.msra.mxu0 0.0
      %580 = vmatprep.subr.mxu0 0.0
      %581 = vmatpush1.msra.mxu0 0.0
      %582 = vmatprep.subr.mxu0 0.0
      %583 = vmatpush1.msra.mxu0 0.0
      %584 = vmatprep.subr.mxu0 0.0
      %585 = vmatpush1.msra.mxu0 0.0
      %586 = vmatprep.subr.mxu0 0.0
      %587 = vmatpush1.msra.mxu0 0.0
      %588 = vmatprep.subr.mxu0 0.0
      %589 = vmatpush1.msra.mxu0 0.0
      %590 = vmatprep.subr.mxu0 0.0
      %591 = vmatpush1.msra.mxu0 0.0
      %592 = vmatprep.subr.mxu0 0.0
      %593 = vmatpush1.msra.mxu0 0.0
      %594 = vmatprep.subr.mxu0 0.0
      %595 = vmatpush1.msra.mxu0 0.0
      %596 = vmatprep.subr.mxu0 0.0
      %597 = vmatpush1.msra.mxu0 0.0
      %598 = vmatprep.subr.mxu0 0.0
      %599 = vmatpush1.msra.mxu0 %v563
      %600 = vmatprep.subr.mxu0 0.0
      %601 = vmatpush2.msra.mxu0 0.0
      %602 = vmatprep.subr.mxu0 0.0
      %603 = vmatpush2.msra.mxu0 0.0
      %604 = vmatprep.subr.mxu0 0.0
      %605 = vmatpush2.msra.mxu0 0.0
      %606 = vmatprep.subr.mxu0 0.0
      %607 = vmatpush2.msra.mxu0 0.0
      %608 = vmatprep.subr.mxu0 0.0
      %609 = vmatpush2.msra.mxu0 0.0
      %610 = vmatprep.subr.mxu0 0.0
      %611 = vmatpush2.msra.mxu0 0.0
      %612 = vmatprep.subr.mxu0 0.0
      %613 = vmatpush2.msra.mxu0 0.0
      %614 = vmatprep.subr.mxu0 0.0
      %615 = vmatpush2.msra.mxu0 0.0
      %616 = vmatprep.subr.mxu0 0.0
      %617 = vmatpush2.msra.mxu0 0.0
      %618 = vmatprep.subr.mxu0 0.0
      %619 = vmatpush2.msra.mxu0 0.0
      %620 = vmatprep.subr.mxu0 0.0
      %621 = vmatpush2.msra.mxu0 0.0
      %622 = vmatprep.subr.mxu0 0.0
      %623 = vmatpush2.msra.mxu0 0.0
      %624 = vmatprep.subr.mxu0 0.0
      %625 = vmatpush2.msra.mxu0 0.0
      %626 = vmatprep.subr.mxu0 0.0
      %627 = vmatpush2.msra.mxu0 0.0
      %628 = vmatprep.subr.mxu0 0.0
      %629 = vmatpush2.msra.mxu0 0.0
      %630 = vmatprep.subr.mxu0 0.0
      %631 = vmatpush2.msra.mxu0 0.0
      %632 = vmatprep.mubr.f32.mxu0 0.0
      %633 = vmatmul.mubr.f32.gmra.mxu0 %v566
      %v634 = vpop.f32.mrf.mxu0
      %v635 = vadd.f32 0.0, %v634
      %v636 = vpop.f32.mrf.mxu0
      %637 = vdwg.mxu0
      %638 = vrot.lane.b32.xlu0 %v306, 112
      %v639 = vpop.permute.xlu0 %638
      %640 = vrot.lane.b32.xlu0 %v303, 80
      %v641 = vpop.permute.xlu0 %640
      %v642 = vsel %vm310, %v639, 0
      %v644 = vsel %vm310, %v641, 0
      %646 = vmatprep.subr.mxu0 0.0
      %647 = vmatpush1.xpose.msra.mxu0 0.0
      %648 = vmatprep.subr.mxu0 0.0
      %649 = vmatpush1.xpose.msra.mxu0 0.0
      %650 = vmatprep.subr.mxu0 0.0
      %651 = vmatpush1.xpose.msra.mxu0 0.0
      %652 = vmatprep.subr.mxu0 0.0
      %653 = vmatpush1.xpose.msra.mxu0 0.0
      %654 = vmatprep.subr.mxu0 0.0
      %655 = vmatpush1.xpose.msra.mxu0 0.0
      %656 = vmatprep.subr.mxu0 0.0
      %657 = vmatpush1.xpose.msra.mxu0 0.0
      %658 = vmatprep.subr.mxu0 0.0
      %659 = vmatpush1.xpose.msra.mxu0 0.0
      %660 = vmatprep.subr.mxu0 0.0
      %661 = vmatpush1.xpose.msra.mxu0 0.0
      %662 = vmatprep.subr.mxu0 0.0
      %663 = vmatpush1.xpose.msra.mxu0 0.0
      %664 = vmatprep.subr.mxu0 0.0
      %665 = vmatpush1.xpose.msra.mxu0 0.0
      %666 = vmatprep.subr.mxu0 0.0
      %667 = vmatpush1.xpose.msra.mxu0 0.0
      %668 = vmatprep.subr.mxu0 0.0
      %669 = vmatpush1.xpose.msra.mxu0 0.0
      %670 = vmatprep.subr.mxu0 0.0
      %671 = vmatpush1.xpose.msra.mxu0 0.0
      %672 = vmatprep.subr.mxu0 0.0
      %673 = vmatpush1.xpose.msra.mxu0 0.0
      %674 = vmatprep.subr.mxu0 0.0
      %675 = vmatpush1.xpose.msra.mxu0 0.0
      %676 = vmatprep.subr.mxu0 0.0
      %677 = vmatpush1.xpose.msra.mxu0 %v644
      %678 = vmatprep.subr.mxu0 0.0
      %679 = vmatpush2.xpose.msra.mxu0 0.0
      %680 = vmatprep.subr.mxu0 0.0
      %681 = vmatpush2.xpose.msra.mxu0 0.0
      %682 = vmatprep.subr.mxu0 0.0
      %683 = vmatpush2.xpose.msra.mxu0 0.0
      %684 = vmatprep.subr.mxu0 0.0
      %685 = vmatpush2.xpose.msra.mxu0 0.0
      %686 = vmatprep.subr.mxu0 0.0
      %687 = vmatpush2.xpose.msra.mxu0 0.0
      %688 = vmatprep.subr.mxu0 0.0
      %689 = vmatpush2.xpose.msra.mxu0 0.0
      %690 = vmatprep.subr.mxu0 0.0
      %691 = vmatpush2.xpose.msra.mxu0 0.0
      %692 = vmatprep.subr.mxu0 0.0
      %693 = vmatpush2.xpose.msra.mxu0 0.0
      %694 = vmatprep.subr.mxu0 0.0
      %695 = vmatpush2.xpose.msra.mxu0 0.0
      %696 = vmatprep.subr.mxu0 0.0
      %697 = vmatpush2.xpose.msra.mxu0 0.0
      %698 = vmatprep.subr.mxu0 0.0
      %699 = vmatpush2.xpose.msra.mxu0 0.0
      %700 = vmatprep.subr.mxu0 0.0
      %701 = vmatpush2.xpose.msra.mxu0 0.0
      %702 = vmatprep.subr.mxu0 0.0
      %703 = vmatpush2.xpose.msra.mxu0 0.0
      %704 = vmatprep.subr.mxu0 0.0
      %705 = vmatpush2.xpose.msra.mxu0 0.0
      %706 = vmatprep.subr.mxu0 0.0
      %707 = vmatpush2.xpose.msra.mxu0 0.0
      %708 = vmatprep.subr.mxu0 0.0
      %709 = vmatpush2.xpose.msra.mxu0 0.0
      %710 = vmatprep.mubr.f32.mxu0 0.0
      %711 = vmatmul.mubr.f32.gmra.mxu0 %v642
      %v712 = vpop.f32.mrf.mxu0
      %v713 = vadd.f32 0.0, %v712
      %v714 = vpop.f32.mrf.mxu0
      %715 = vdwg.mxu0
      %v716 = vsel %vm310, %v713, -inf
      %717 = vmax.xlane.f32.xlu0 %v716
      %v718 = vpop.xlane.xlu0 %717
      %v719 = vsub.f32 %v713, %v718
      %v720 = vmul.f32 %v719, 1.442695
      %v721 = vpow.pop %v720
      %v722 = vsel %vm310, %v721, 0.0
      %723 = vadd.xlane.f32.xlu0 %v722
      %v724 = vpop.xlane.xlu0 %723
      %v725 = vrcp.pop %v724
      %v726 = vmul.f32 %v721, %v725
      %727 = vrot.lane.b32.xlu0 %v303, 48
      %v728 = vpop.permute.xlu0 %727
      %v731 = vsel %vm310, %v726, 0
      %733 = vmatprep.subr.mxu0 0.0
      %734 = vmatpush1.msra.mxu0 0.0
      %735 = vmatprep.subr.mxu0 0.0
      %736 = vmatpush1.msra.mxu0 0.0
      %737 = vmatprep.subr.mxu0 0.0
      %738 = vmatpush1.msra.mxu0 0.0
      %739 = vmatprep.subr.mxu0 0.0
      %740 = vmatpush1.msra.mxu0 0.0
      %741 = vmatprep.subr.mxu0 0.0
      %742 = vmatpush1.msra.mxu0 0.0
      %743 = vmatprep.subr.mxu0 0.0
      %744 = vmatpush1.msra.mxu0 0.0
      %745 = vmatprep.subr.mxu0 0.0
      %746 = vmatpush1.msra.mxu0 0.0
      %747 = vmatprep.subr.mxu0 0.0
      %748 = vmatpush1.msra.mxu0 0.0
      %749 = vmatprep.subr.mxu0 0.0
      %750 = vmatpush1.msra.mxu0 0.0
      %751 = vmatprep.subr.mxu0 0.0
      %752 = vmatpush1.msra.mxu0 0.0
      %753 = vmatprep.subr.mxu0 0.0
      %754 = vmatpush1.msra.mxu0 0.0
      %755 = vmatprep.subr.mxu0 0.0
      %756 = vmatpush1.msra.mxu0 0.0
      %757 = vmatprep.subr.mxu0 0.0
      %758 = vmatpush1.msra.mxu0 0.0
      %759 = vmatprep.subr.mxu0 0.0
      %760 = vmatpush1.msra.mxu0 0.0
      %761 = vmatprep.subr.mxu0 0.0
      %762 = vmatpush1.msra.mxu0 0.0
      %763 = vmatprep.subr.mxu0 0.0
      %764 = vmatpush1.msra.mxu0 %v728
      %765 = vmatprep.subr.mxu0 0.0
      %766 = vmatpush2.msra.mxu0 0.0
      %767 = vmatprep.subr.mxu0 0.0
      %768 = vmatpush2.msra.mxu0 0.0
      %769 = vmatprep.subr.mxu0 0.0
      %770 = vmatpush2.msra.mxu0 0.0
      %771 = vmatprep.subr.mxu0 0.0
      %772 = vmatpush2.msra.mxu0 0.0
      %773 = vmatprep.subr.mxu0 0.0
      %774 = vmatpush2.msra.mxu0 0.0
      %775 = vmatprep.subr.mxu0 0.0
      %776 = vmatpush2.msra.mxu0 0.0
      %777 = vmatprep.subr.mxu0 0.0
      %778 = vmatpush2.msra.mxu0 0.0
      %779 = vmatprep.subr.mxu0 0.0
      %780 = vmatpush2.msra.mxu0 0.0
      %781 = vmatprep.subr.mxu0 0.0
      %782 = vmatpush2.msra.mxu0 0.0
      %783 = vmatprep.subr.mxu0 0.0
      %784 = vmatpush2.msra.mxu0 0.0
      %785 = vmatprep.subr.mxu0 0.0
      %786 = vmatpush2.msra.mxu0 0.0
      %787 = vmatprep.subr.mxu0 0.0
      %788 = vmatpush2.msra.mxu0 0.0
      %789 = vmatprep.subr.mxu0 0.0
      %790 = vmatpush2.msra.mxu0 0.0
      %791 = vmatprep.subr.mxu0 0.0
      %792 = vmatpush2.msra.mxu0 0.0
      %793 = vmatprep.subr.mxu0 0.0
      %794 = vmatpush2.msra.mxu0 0.0
      %795 = vmatprep.subr.mxu0 0.0
      %796 = vmatpush2.msra.mxu0 0.0
      %797 = vmatprep.mubr.f32.mxu0 0.0
      %798 = vmatmul.mubr.f32.gmra.mxu0 %v731
      %v799 = vpop.f32.mrf.mxu0
      %v800 = vadd.f32 0.0, %v799
      %v801 = vpop.f32.mrf.mxu0
      %802 = vdwg.mxu0
      %803 = vrot.lane.b32.xlu0 %v306, 104
      %v804 = vpop.permute.xlu0 %803
      %805 = vrot.lane.b32.xlu0 %v303, 72
      %v806 = vpop.permute.xlu0 %805
      %v807 = vsel %vm310, %v804, 0
      %v809 = vsel %vm310, %v806, 0
      %811 = vmatprep.subr.mxu0 0.0
      %812 = vmatpush1.xpose.msra.mxu0 0.0
      %813 = vmatprep.subr.mxu0 0.0
      %814 = vmatpush1.xpose.msra.mxu0 0.0
      %815 = vmatprep.subr.mxu0 0.0
      %816 = vmatpush1.xpose.msra.mxu0 0.0
      %817 = vmatprep.subr.mxu0 0.0
      %818 = vmatpush1.xpose.msra.mxu0 0.0
      %819 = vmatprep.subr.mxu0 0.0
      %820 = vmatpush1.xpose.msra.mxu0 0.0
      %821 = vmatprep.subr.mxu0 0.0
      %822 = vmatpush1.xpose.msra.mxu0 0.0
      %823 = vmatprep.subr.mxu0 0.0
      %824 = vmatpush1.xpose.msra.mxu0 0.0
      %825 = vmatprep.subr.mxu0 0.0
      %826 = vmatpush1.xpose.msra.mxu0 0.0
      %827 = vmatprep.subr.mxu0 0.0
      %828 = vmatpush1.xpose.msra.mxu0 0.0
      %829 = vmatprep.subr.mxu0 0.0
      %830 = vmatpush1.xpose.msra.mxu0 0.0
      %831 = vmatprep.subr.mxu0 0.0
      %832 = vmatpush1.xpose.msra.mxu0 0.0
      %833 = vmatprep.subr.mxu0 0.0
      %834 = vmatpush1.xpose.msra.mxu0 0.0
      %835 = vmatprep.subr.mxu0 0.0
      %836 = vmatpush1.xpose.msra.mxu0 0.0
      %837 = vmatprep.subr.mxu0 0.0
      %838 = vmatpush1.xpose.msra.mxu0 0.0
      %839 = vmatprep.subr.mxu0 0.0
      %840 = vmatpush1.xpose.msra.mxu0 0.0
      %841 = vmatprep.subr.mxu0 0.0
      %842 = vmatpush1.xpose.msra.mxu0 %v809
      %843 = vmatprep.subr.mxu0 0.0
      %844 = vmatpush2.xpose.msra.mxu0 0.0
      %845 = vmatprep.subr.mxu0 0.0
      %846 = vmatpush2.xpose.msra.mxu0 0.0
      %847 = vmatprep.subr.mxu0 0.0
      %848 = vmatpush2.xpose.msra.mxu0 0.0
      %849 = vmatprep.subr.mxu0 0.0
      %850 = vmatpush2.xpose.msra.mxu0 0.0
      %851 = vmatprep.subr.mxu0 0.0
      %852 = vmatpush2.xpose.msra.mxu0 0.0
      %853 = vmatprep.subr.mxu0 0.0
      %854 = vmatpush2.xpose.msra.mxu0 0.0
      %855 = vmatprep.subr.mxu0 0.0
      %856 = vmatpush2.xpose.msra.mxu0 0.0
      %857 = vmatprep.subr.mxu0 0.0
      %858 = vmatpush2.xpose.msra.mxu0 0.0
      %859 = vmatprep.subr.mxu0 0.0
      %860 = vmatpush2.xpose.msra.mxu0 0.0
      %861 = vmatprep.subr.mxu0 0.0
      %862 = vmatpush2.xpose.msra.mxu0 0.0
      %863 = vmatprep.subr.mxu0 0.0
      %864 = vmatpush2.xpose.msra.mxu0 0.0
      %865 = vmatprep.subr.mxu0 0.0
      %866 = vmatpush2.xpose.msra.mxu0 0.0
      %867 = vmatprep.subr.mxu0 0.0
      %868 = vmatpush2.xpose.msra.mxu0 0.0
      %869 = vmatprep.subr.mxu0 0.0
      %870 = vmatpush2.xpose.msra.mxu0 0.0
      %871 = vmatprep.subr.mxu0 0.0
      %872 = vmatpush2.xpose.msra.mxu0 0.0
      %873 = vmatprep.subr.mxu0 0.0
      %874 = vmatpush2.xpose.msra.mxu0 0.0
      %875 = vmatprep.mubr.f32.mxu0 0.0
      %876 = vmatmul.mubr.f32.gmra.mxu0 %v807
      %v877 = vpop.f32.mrf.mxu0
      %v878 = vadd.f32 0.0, %v877
      %v879 = vpop.f32.mrf.mxu0
      %880 = vdwg.mxu0
      %v881 = vsel %vm310, %v878, -inf
      %882 = vmax.xlane.f32.xlu0 %v881
      %v883 = vpop.xlane.xlu0 %882
      %v884 = vsub.f32 %v878, %v883
      %v885 = vmul.f32 %v884, 1.442695
      %v886 = vpow.pop %v885
      %v887 = vsel %vm310, %v886, 0.0
      %888 = vadd.xlane.f32.xlu0 %v887
      %v889 = vpop.xlane.xlu0 %888
      %v890 = vrcp.pop %v889
      %v891 = vmul.f32 %v886, %v890
      %892 = vrot.lane.b32.xlu0 %v303, 40
      %v893 = vpop.permute.xlu0 %892
      %v896 = vsel %vm310, %v891, 0
      %898 = vmatprep.subr.mxu0 0.0
      %899 = vmatpush1.msra.mxu0 0.0
      %900 = vmatprep.subr.mxu0 0.0
      %901 = vmatpush1.msra.mxu0 0.0
      %902 = vmatprep.subr.mxu0 0.0
      %903 = vmatpush1.msra.mxu0 0.0
      %904 = vmatprep.subr.mxu0 0.0
      %905 = vmatpush1.msra.mxu0 0.0
      %906 = vmatprep.subr.mxu0 0.0
      %907 = vmatpush1.msra.mxu0 0.0
      %908 = vmatprep.subr.mxu0 0.0
      %909 = vmatpush1.msra.mxu0 0.0
      %910 = vmatprep.subr.mxu0 0.0
      %911 = vmatpush1.msra.mxu0 0.0
      %912 = vmatprep.subr.mxu0 0.0
      %913 = vmatpush1.msra.mxu0 0.0
      %914 = vmatprep.subr.mxu0 0.0
      %915 = vmatpush1.msra.mxu0 0.0
      %916 = vmatprep.subr.mxu0 0.0
      %917 = vmatpush1.msra.mxu0 0.0
      %918 = vmatprep.subr.mxu0 0.0
      %919 = vmatpush1.msra.mxu0 0.0
      %920 = vmatprep.subr.mxu0 0.0
      %921 = vmatpush1.msra.mxu0 0.0
      %922 = vmatprep.subr.mxu0 0.0
      %923 = vmatpush1.msra.mxu0 0.0
      %924 = vmatprep.subr.mxu0 0.0
      %925 = vmatpush1.msra.mxu0 0.0
      %926 = vmatprep.subr.mxu0 0.0
      %927 = vmatpush1.msra.mxu0 0.0
      %928 = vmatprep.subr.mxu0 0.0
      %929 = vmatpush1.msra.mxu0 %v893
      %930 = vmatprep.subr.mxu0 0.0
      %931 = vmatpush2.msra.mxu0 0.0
      %932 = vmatprep.subr.mxu0 0.0
      %933 = vmatpush2.msra.mxu0 0.0
      %934 = vmatprep.subr.mxu0 0.0
      %935 = vmatpush2.msra.mxu0 0.0
      %936 = vmatprep.subr.mxu0 0.0
      %937 = vmatpush2.msra.mxu0 0.0
      %938 = vmatprep.subr.mxu0 0.0
      %939 = vmatpush2.msra.mxu0 0.0
      %940 = vmatprep.subr.mxu0 0.0
      %941 = vmatpush2.msra.mxu0 0.0
      %942 = vmatprep.subr.mxu0 0.0
      %943 = vmatpush2.msra.mxu0 0.0
      %944 = vmatprep.subr.mxu0 0.0
      %945 = vmatpush2.msra.mxu0 0.0
      %946 = vmatprep.subr.mxu0 0.0
      %947 = vmatpush2.msra.mxu0 0.0
      %948 = vmatprep.subr.mxu0 0.0
      %949 = vmatpush2.msra.mxu0 0.0
      %950 = vmatprep.subr.mxu0 0.0
      %951 = vmatpush2.msra.mxu0 0.0
      %952 = vmatprep.subr.mxu0 0.0
      %953 = vmatpush2.msra.mxu0 0.0
      %954 = vmatprep.subr.mxu0 0.0
      %955 = vmatpush2.msra.mxu0 0.0
      %956 = vmatprep.subr.mxu0 0.0
      %957 = vmatpush2.msra.mxu0 0.0
      %958 = vmatprep.subr.mxu0 0.0
      %959 = vmatpush2.msra.mxu0 0.0
      %960 = vmatprep.subr.mxu0 0.0
      %961 = vmatpush2.msra.mxu0 0.0
      %962 = vmatprep.mubr.f32.mxu0 0.0
      %963 = vmatmul.mubr.f32.gmra.mxu0 %v896
      %v964 = vpop.f32.mrf.mxu0
      %v965 = vadd.f32 0.0, %v964
      %v966 = vpop.f32.mrf.mxu0
      %967 = vdwg.mxu0
      %969 = vrot.lane.b32.xlu0 %v635, 8
      %v970 = vpop.permute.xlu0 %969
      %973 = vrot.lane.b32.xlu0 %v800, 16
      %v974 = vpop.permute.xlu0 %973
      %977 = vrot.lane.b32.xlu0 %v965, 24
      %v978 = vpop.permute.xlu0 %977
      %v980 = vsel %vm310, %v470, %v970
      %vm981 = vcmask 130048
      %v982 = vsel %vm981, %v980, %v974
      %vm983 = vcmask 195584
      %v984 = vsel %vm983, %v982, %v978
      %v985 = vld [vmem:[%s3] sm:$0xff]
      %v986 = vld [vmem:[%s3 + $0x8] sm:$0xff]
      %v987 = vld [vmem:[%s3 + $0x10] sm:$0xff]
      %v988 = vld [vmem:[%s3 + $0x18] sm:$0xff]
      %v989 = vld [vmem:[%s4] sm:$0x1]
      %v991 = vlaneseq
      %v992 = vshrl.u32 %v991, 7
      %v993 = vsub.s32 0, %v992
      %v994 = vrot.slane %v989, %v993
      %v997 = vsel %vm232, %v984, 0
      %999 = vmatprep.subr.mxu0 0.0
      %1000 = vmatpush1.msra.mxu0 0.0
      %1001 = vmatprep.subr.mxu0 0.0
      %1002 = vmatpush1.msra.mxu0 0.0
      %1003 = vmatprep.subr.mxu0 0.0
      %1004 = vmatpush1.msra.mxu0 0.0
      %1005 = vmatprep.subr.mxu0 0.0
      %1006 = vmatpush1.msra.mxu0 0.0
      %1007 = vmatprep.subr.mxu0 0.0
      %1008 = vmatpush1.msra.mxu0 0.0
      %1009 = vmatprep.subr.mxu0 0.0
      %1010 = vmatpush1.msra.mxu0 0.0
      %1011 = vmatprep.subr.mxu0 0.0
      %1012 = vmatpush1.msra.mxu0 0.0
      %1013 = vmatprep.subr.mxu0 0.0
      %1014 = vmatpush1.msra.mxu0 0.0
      %1015 = vmatprep.subr.mxu0 0.0
      %1016 = vmatpush1.msra.mxu0 0.0
      %1017 = vmatprep.subr.mxu0 0.0
      %1018 = vmatpush1.msra.mxu0 0.0
      %1019 = vmatprep.subr.mxu0 0.0
      %1020 = vmatpush1.msra.mxu0 0.0
      %1021 = vmatprep.subr.mxu0 0.0
      %1022 = vmatpush1.msra.mxu0 0.0
      %1023 = vmatprep.subr.mxu0 0.0
      %1024 = vmatpush1.msra.mxu0 %v988
      %1025 = vmatprep.subr.mxu0 0.0
      %1026 = vmatpush1.msra.mxu0 %v987
      %1027 = vmatprep.subr.mxu0 0.0
      %1028 = vmatpush1.msra.mxu0 %v986
      %1029 = vmatprep.subr.mxu0 0.0
      %1030 = vmatpush1.msra.mxu0 %v985
      %1031 = vmatprep.subr.mxu0 0.0
      %1032 = vmatpush2.msra.mxu0 0.0
      %1033 = vmatprep.subr.mxu0 0.0
      %1034 = vmatpush2.msra.mxu0 0.0
      %1035 = vmatprep.subr.mxu0 0.0
      %1036 = vmatpush2.msra.mxu0 0.0
      %1037 = vmatprep.subr.mxu0 0.0
      %1038 = vmatpush2.msra.mxu0 0.0
      %1039 = vmatprep.subr.mxu0 0.0
      %1040 = vmatpush2.msra.mxu0 0.0
      %1041 = vmatprep.subr.mxu0 0.0
      %1042 = vmatpush2.msra.mxu0 0.0
      %1043 = vmatprep.subr.mxu0 0.0
      %1044 = vmatpush2.msra.mxu0 0.0
      %1045 = vmatprep.subr.mxu0 0.0
      %1046 = vmatpush2.msra.mxu0 0.0
      %1047 = vmatprep.subr.mxu0 0.0
      %1048 = vmatpush2.msra.mxu0 0.0
      %1049 = vmatprep.subr.mxu0 0.0
      %1050 = vmatpush2.msra.mxu0 0.0
      %1051 = vmatprep.subr.mxu0 0.0
      %1052 = vmatpush2.msra.mxu0 0.0
      %1053 = vmatprep.subr.mxu0 0.0
      %1054 = vmatpush2.msra.mxu0 0.0
      %1055 = vmatprep.subr.mxu0 0.0
      %1056 = vmatpush2.msra.mxu0 0.0
      %1057 = vmatprep.subr.mxu0 0.0
      %1058 = vmatpush2.msra.mxu0 0.0
      %1059 = vmatprep.subr.mxu0 0.0
      %1060 = vmatpush2.msra.mxu0 0.0
      %1061 = vmatprep.subr.mxu0 0.0
      %1062 = vmatpush2.msra.mxu0 0.0
      %1063 = vmatprep.mubr.f32.mxu0 0.0
      %1064 = vmatmul.mubr.f32.gmra.mxu0 %v997
      %v1065 = vpop.f32.mrf.mxu0
      %v1066 = vadd.f32 %v994, %v1065
      %v1067 = vpop.f32.mrf.mxu0
      %1068 = vdwg.mxu0
      %1069 = vst.msk [vmem:[%s219] sm:$0xff] %vm232, %v1066
      %p1070 = scmp.lt.s32.totalorder %s16, 1
      %s1071 = scalar_select %p1070, %s16, 1
      %s1072 = smul.addr %s1071, 8
      %s1073 = scalar_lea.vmem %s5, %s1072
      // Predicated region
      $region41: #{transformer_encoder_layer.2} parent=39 // pred_check
        %p1074 = pneg %p144
      $region42: #{transformer_encoder_layer.2} parent=39 // pred_check_branch
        %1076 = sbr.rel (%p1074) target = $region44
      $region43: #{transformer_encoder_layer.2} parent=39 // pred_region
        _
      $region44: #{transformer_encoder_layer.2} parent=39 // pred_fallthru
        _
    $region40: #{transformer_encoder_layer.2} parent=5 // pred_fallthru
      _
    %p1077 = scmp.le.s32.totalorder 2, %s11
    // Predicated region
    $region45: #{transformer_encoder_layer.2} parent=5 // pred_check
      %p1078 = pneg %p1077
    $region46: #{transformer_encoder_layer.2} parent=5 // pred_check_branch
      %1080 = sbr.rel (%p1078) target = $region48
    $region47: #{transformer_encoder_layer.2} parent=5 // pred_region
      %s1081 = ssub.s32 %s11, 2
      // Predicated region
      $region49: #{transformer_encoder_layer.2} parent=47 // pred_check
        %p1082 = pneg %p150
      $region50: #{transformer_encoder_layer.2} parent=47 // pred_check_branch
        %1084 = sbr.rel (%p1082) target = $region52
      $region51: #{transformer_encoder_layer.2} parent=47 // pred_region
        %p1085 = scmp.lt.s32.totalorder %s17, 1
        %s1086 = scalar_select %p1085, %s17, 1
        %s1087 = smul.addr %s1086, 8
        %s1088 = scalar_lea.vmem %s5, %s1087
      $region52: #{transformer_encoder_layer.2} parent=47 // pred_fallthru
        _
    $region48: #{transformer_encoder_layer.2} parent=5 // pred_fallthru
      _
  $region6: #{transformer_encoder_layer.2} parent=0 // loop_footer
    %s15 = sadd.s32 1, %s11
  $region7: #{transformer_encoder_layer.2} parent=0 // loop_footer_branch
    %10 = sbr.rel target = $region3
  $region8: #{transformer_encoder_layer.2} parent=0 // loop_exit
    _

</llo_original>
